<compile_context>
chip_gen: v6e
topology: v6e:2x2x1
jax: 0.10.0
libtpu: 0.0.40
codegen_flags: <defaults>
</compile_context>

<pallas_src>
import functools

import jax
import jax.numpy as jnp
from jax.experimental import pallas as pl
from jax.experimental.pallas import tpu as pltpu

ATOM_N, ATOM_CA, ATOM_C = 0, 1, 2
NUM_PE_FUNCS = 3                                           # PositionalEncoding num_funcs
FREQ_BANDS = tuple(2.0 ** i for i in range(NUM_PE_FUNCS))  # (1., 2., 4.)


def pe_out_dim(in_dim):
    return in_dim * (2 * NUM_PE_FUNCS + 1)


# --------------------------- plain-JAX glue (geometry / knn / gather) ---------------------------

def _normalize(v, eps=1e-8):
    return v / (jnp.linalg.norm(v, axis=-1, keepdims=True) + eps)


def construct_3d_basis(center, p1, p2):
    v1 = p1 - center
    e1 = _normalize(v1)
    v2 = p2 - center
    u2 = v2 - jnp.sum(e1 * v2, axis=-1, keepdims=True) * e1
    e2 = _normalize(u2)
    e3 = jnp.cross(e1, e2)
    return jnp.stack([e1, e2, e3], axis=-1)               # (N, L, 3, 3), basis vectors as columns


def positional_encoding(x):
    freqs = jnp.asarray(FREQ_BANDS, dtype=x.dtype)
    xe = x[..., None]                                      # (..., d, 1)
    code = jnp.concatenate([xe, jnp.sin(xe * freqs), jnp.cos(xe * freqs)], axis=-1)
    return code.reshape(x.shape[:-1] + (pe_out_dim(x.shape[-1]),))


def knn_gather(idx, value):
    # idx: (N, L, K) int32, value: (N, M, C) -> (N, L, K, C)
    return jax.vmap(lambda v, i: v[i])(value, idx)


def preprocess(params, pos14, res_feat, aa, mask_atom, n_knn):
    """Geometry, embedding, knn selection + gather (data-dependent access -> plain JAX glue).

    Pure math is kept f32; the pad-to-128 / bf16 cast happens in point_block_pallas, and
    because everything runs under one jit the gather/concat fusion writes the padded bf16
    h_in directly (no f32 HBM round-trip).
    """
    N, L = aa.shape
    F = res_feat.shape[-1]
    mask_atom = mask_atom.astype(jnp.float32)
    mask_res = mask_atom[:, :, ATOM_CA]                    # (N, L)
    mask_flat = mask_atom.reshape(N, L * 14)               # (N, 14L)

    R = construct_3d_basis(pos14[:, :, ATOM_CA], pos14[:, :, ATOM_C], pos14[:, :, ATOM_N])
    R = jnp.where(mask_res[..., None, None] > 0, R, jnp.eye(3, dtype=R.dtype))
    t = pos14[:, :, ATOM_CA] * mask_res[..., None]

    atom_type = aa[..., None] * 14 + jnp.arange(14, dtype=aa.dtype)   # (N, L, 14)
    rep = jnp.repeat(res_feat[:, :, None, :], 14, axis=2)             # (N, L, 14, F)
    emb = params["embed"][atom_type]                                  # (N, L, 14, F)
    # faithful to torch.cat([...], dim=2).reshape(N, L*14, -1)
    atom_feat = jnp.concatenate([rep, emb], axis=2).reshape(N, L * 14, 2 * F)

    pos_ca = pos14[:, :, ATOM_CA, :]
    pos_all = pos14.reshape(N, L * 14, 3)
    d = jnp.sqrt(jnp.sum((pos_ca[:, :, None, :] - pos_all[:, None, :, :]) ** 2, axis=-1))
    d = jnp.where(mask_flat[:, None, :] > 0, d, jnp.inf)

    # TODO(synk): PyTorch clamps k to min(valid atom count, n_knn); that is a data-dependent
    # shape (host sync + per-batch recompiles).  k is fixed to n_knn here; valid whenever each
    # structure has >= n_knn unmasked atoms (true for real proteins and the test inputs).
    k = n_knn
    _, knn_idx = jax.lax.top_k(-d, k)                                  # k smallest distances
    # TODO(synk): torch.topk tie-breaking order is not reproduced bit-exactly; set of knn indices matches.

    pos_j = knn_gather(knn_idx, pos_all)                               # (N, L, k, 3)
    pos_ij = jnp.einsum("nlji,nlkj->nlki", R, pos_j - t[:, :, None, :])  # R^T (q - t)
    dist_ij = jnp.sqrt(jnp.maximum(jnp.sum(pos_ij ** 2, axis=-1, keepdims=True), 1e-8))
    spatial_ij = positional_encoding(jnp.concatenate([pos_ij, dist_ij], axis=-1))
    feat_j = knn_gather(knn_idx, atom_feat)                            # (N, L, k, 2F)
    h_in = jnp.concatenate([spatial_ij, feat_j], axis=-1)              # (N, L, k, Din)

    return (h_in.reshape(N * L, k, -1),
            res_feat.reshape(N * L, F).astype(jnp.float32),
            mask_res.reshape(N * L, 1).astype(jnp.float32))


# ------------------------------------ Pallas TPU kernel -----------------------------------------

def _point_block_kernel(h_in_ref, res_ref, mask_ref,
                        w1_ref, b1_ref, w2_ref, b2_ref, w3_ref, b3_ref,
                        wr1_ref, br1_ref, wr2_ref, br2_ref, wr3_ref, br3_ref,
                        gamma_ref, beta_ref, out_ref):
    TR, K, Dp = h_in_ref.shape
    F = out_ref.shape[-1]
    bf16 = jnp.bfloat16
    dot = functools.partial(jnp.dot, preferred_element_type=jnp.float32)

    # ---- point MLP over (TR*K, Dp): bf16 MXU operands, f32 accumulation; intermediates are
    #      materialized in bf16 at creation to halve VMEM/spill traffic of the big temporaries.
    h = h_in_ref[...].reshape(TR * K, Dp)                               # bf16
    h = jnp.maximum(dot(h, w1_ref[...]) + b1_ref[...], 0.0).astype(bf16)
    h = jnp.maximum(dot(h, w2_ref[...]) + b2_ref[...], 0.0).astype(bf16)
    h = (dot(h, w3_ref[...]) + b3_ref[...]).reshape(TR, K, F)           # f32 for pooling

    # ---- mean / max pooling over the K neighbors (sublane reduction), kept f32 ----
    h_mean = jnp.mean(h, axis=1)
    h_max = jnp.max(h, axis=1)

    # ---- residue MLP; first layer's weight is split so we avoid a lane-dim concat ----
    r = jnp.maximum(dot(h_mean.astype(bf16), wr1_ref[:F, :])
                    + dot(h_max.astype(bf16), wr1_ref[F:, :]) + br1_ref[...], 0.0)
    r = jnp.maximum(dot(r.astype(bf16), wr2_ref[...]) + br2_ref[...], 0.0)
    r = dot(r.astype(bf16), wr3_ref[...]) + br3_ref[...]

    # ---- residual + LayerNorm(eps=1e-5) + residue mask, all f32 ----
    y = res_ref[...] + r
    mu = jnp.mean(y, axis=-1, keepdims=True)
    var = jnp.mean((y - mu) ** 2, axis=-1, keepdims=True)
    y = (y - mu) * jax.lax.rsqrt(var + 1e-5)
    y = y * gamma_ref[...] + beta_ref[...]
    out_ref[...] = (y * mask_ref[...]).astype(out_ref.dtype)


def point_block_pallas(h_in, res_flat, mask_res, params, tile_rows=1024):
    NL, K, Din = h_in.shape
    F = res_flat.shape[-1]
    F2 = 2 * F
    bf16 = jnp.bfloat16

    def _nbytes(x):
        return int(x.size) * int(jnp.dtype(x.dtype).itemsize)

    # --- lane-align the hottest contraction: Din (92) -> Dp (128); fused under the caller's
    #     jit so only the padded bf16 tensor is ever written to HBM.  (On v5e, which sits on
    #     the HBM roofline, shipping spatial(28)/feat(64) unpadded and splitting w1 saves the
    #     28% pad traffic; kept padded here as the aligned, known-good MXU path.) ---
    Dp = ((Din + 127) // 128) * 128
    if Dp != Din:
        h_in = jnp.pad(h_in, ((0, 0), (0, 0), (0, Dp - Din)))
    h_in = h_in.astype(bf16)

    # --- row tiling: big tiles amortize the ~0.35us/step pipeline overhead, but keep >=4
    #     grid steps when the problem allows (v7x megacore + DMA/compute overlap need >=2).
    nl_pad8 = ((NL + 7) // 8) * 8
    tile_rows = max(8, (int(tile_rows) // 8) * 8)
    steps_cap = max(8, ((nl_pad8 // 4) // 8) * 8)          # aim for >= 4 grid steps
    tile_rows = max(8, min(tile_rows, steps_cap, nl_pad8))
    nlp = ((NL + tile_rows - 1) // tile_rows) * tile_rows
    pad = nlp - NL
    if pad:
        h_in = jnp.pad(h_in, ((0, pad), (0, 0), (0, 0)))
        res_flat = jnp.pad(res_flat, ((0, pad), (0, 0)))
        mask_res = jnp.pad(mask_res, ((0, pad), (0, 0)))

    # --- bf16 MXU operands (f32 accumulation in-kernel); biases / LN params stay f32 ---
    w1p = jnp.pad(params["w1"], ((0, Dp - Din), (0, 0))).astype(bf16)
    weights = [
        w1p, params["b1"],
        params["w2"].astype(bf16), params["b2"],
        params["w3"].astype(bf16), params["b3"],
        params["wr1"].astype(bf16), params["br1"],
        params["wr2"].astype(bf16), params["br2"],
        params["wr3"].astype(bf16), params["br3"],
        params["gamma"], params["beta"],
    ]

    # weight/bias/gamma/beta blocks have a constant index_map -> loaded once, stay resident.
    # (pl.Buffered(1) on them / Buffered(3) on h_in for v5e are possible further tweaks.)
    in_specs = ([pl.BlockSpec((tile_rows, K, Dp), lambda i: (i, 0, 0)),
                 pl.BlockSpec((tile_rows, F), lambda i: (i, 0)),
                 pl.BlockSpec((tile_rows, 1), lambda i: (i, 0))]
                + [pl.BlockSpec(w.shape, lambda i: (0, 0)) for w in weights])

    # --- VMEM budget from the actual working set, clamped to <=32 MiB (v7x physical is 64) ---
    io_row_bytes = K * Dp * 2 + F * 4 + 4 + F * 4            # h_in + res + mask + out per row
    tmp_row_bytes = K * (2 * F2 * 2 + F * 4)                 # bf16 layer-1/2 + f32 layer-3 temps
    weight_bytes = sum(_nbytes(w) for w in weights)
    vmem_need = 2 * tile_rows * io_row_bytes + 2 * tile_rows * tmp_row_bytes + 2 * weight_bytes
    vmem_limit = int(min(max(vmem_need + (4 << 20), 16 << 20), 32 << 20))

    # advisory cost estimate so XLA schedules the surrounding gather/preprocess HLO sensibly
    flops = 2 * nlp * (K * (Dp * F2 + F2 * F2 + F2 * F) + F2 * F + F * F + F * F)
    bytes_accessed = (_nbytes(h_in) + _nbytes(res_flat) + _nbytes(mask_res)
                      + nlp * F * 4 + weight_bytes)
    cost = pl.CostEstimate(flops=flops, transcendentals=0, bytes_accessed=bytes_accessed)

    out = pl.pallas_call(
        _point_block_kernel,
        out_shape=jax.ShapeDtypeStruct((nlp, F), jnp.float32),
        grid_spec=pltpu.PrefetchScalarGridSpec(
            num_scalar_prefetch=0,
            grid=(nlp // tile_rows,),
            in_specs=in_specs,
            out_specs=pl.BlockSpec((tile_rows, F), lambda i: (i, 0)),
        ),
        compiler_params=pltpu.CompilerParams(
            dimension_semantics=("parallel",),
            vmem_limit_bytes=vmem_limit,
        ),
        cost_estimate=cost,
    )(h_in, res_flat, mask_res, *weights)
    return out[:NL]


# single jit around preprocess + kernel: the cast/pad of h_in fuses into the gather/concat,
# so the dominant tensor is written to HBM once, in bf16, already in the kernel's layout.
@functools.partial(jax.jit, static_argnames=("n_knn", "tile_rows"))
def point_encoding_forward(params, pos14, res_feat, aa, mask_atom, n_knn, tile_rows=1024):
    N, L = aa.shape
    h_in, res_flat, mask_res = preprocess(params, pos14, res_feat, aa, mask_atom, n_knn)
    out = point_block_pallas(h_in, res_flat, mask_res, params, tile_rows=tile_rows)
    return out.reshape(N, L, -1)


# --------------------------------- parameters & pure-JAX reference ------------------------------

def init_params(key, feat_dim):
    din = pe_out_dim(3 + 1) + 2 * feat_dim
    dims = {
        "w1": (din, 2 * feat_dim), "w2": (2 * feat_dim, 2 * feat_dim), "w3": (2 * feat_dim, feat_dim),
        "wr1": (2 * feat_dim, feat_dim), "wr2": (feat_dim, feat_dim), "wr3": (feat_dim, feat_dim),
    }
    keys = jax.random.split(key, 2 * len(dims) + 1)
    params = {"embed": jax.random.normal(keys[0], (21 * 14, feat_dim), jnp.float32) * 0.1}
    for i, (name, shape) in enumerate(dims.items()):
        kw, kb = keys[1 + 2 * i], keys[2 + 2 * i]
        params[name] = jax.random.normal(kw, shape, jnp.float32) / jnp.sqrt(shape[0])
        params["b" + name[1:]] = jax.random.normal(kb, (1, shape[1]), jnp.float32) * 0.02
    params["gamma"] = jnp.ones((1, feat_dim), jnp.float32)
    params["beta"] = jnp.zeros((1, feat_dim), jnp.float32)
    return params


def reference_forward(params, pos14, res_feat, aa, mask_atom, n_knn):
    h_in, res_flat, mask_res = preprocess(params, pos14, res_feat, aa, mask_atom, n_knn)
    dot = functools.partial(jnp.dot, precision=jax.lax.Precision.HIGHEST)
    NL, K, Din = h_in.shape
    F = res_flat.shape[-1]
    h = h_in.reshape(NL * K, Din)
    h = jnp.maximum(dot(h, params["w1"]) + params["b1"], 0.0)
    h = jnp.maximum(dot(h, params["w2"]) + params["b2"], 0.0)
    h = (dot(h, params["w3"]) + params["b3"]).reshape(NL, K, F)
    h_pool = jnp.concatenate([h.mean(1), h.max(1)], axis=-1)
    r = jnp.maximum(dot(h_pool, params["wr1"]) + params["br1"], 0.0)
    r = jnp.maximum(dot(r, params["wr2"]) + params["br2"], 0.0)
    r = dot(r, params["wr3"]) + params["br3"]
    y = res_flat + r
    mu = y.mean(-1, keepdims=True)
    var = ((y - mu) ** 2).mean(-1, keepdims=True)
    y = (y - mu) * jax.lax.rsqrt(var + 1e-5) * params["gamma"] + params["beta"]
    return y * mask_res


# --------------------------------------------- main ---------------------------------------------

if __name__ == "__main__":
    N, L, feat_dim, n_knn = 2, 16, 32, 8
    key = jax.random.PRNGKey(0)
    kp, kpos, kfeat, kaa = jax.random.split(key, 4)
    params = init_params(kp, feat_dim)

    pos14 = jax.random.normal(kpos, (N, L, 14, 3), jnp.float32) * 3.0
    res_feat = jax.random.normal(kfeat, (N, L, feat_dim), jnp.float32)
    aa = jax.random.randint(kaa, (N, L), 0, 21, jnp.int32)
    mask_atom = jnp.ones((N, L, 14), jnp.float32)
    mask_atom = mask_atom.at[0, 3, 10:].set(0.0)   # some missing side-chain atoms
    mask_atom = mask_atom.at[1, 7, :].set(0.0)     # one fully masked residue

    out = point_encoding_forward(params, pos14, res_feat, aa, mask_atom, n_knn=n_knn)
    jax.block_until_ready(out)

    ref = reference_forward(params, pos14, res_feat, aa, mask_atom, n_knn).reshape(N, L, feat_dim)
    assert out.shape == (N, L, feat_dim)
    assert bool(jnp.all(jnp.isfinite(out)))
    # kernel uses bf16 MXU operands with f32 accumulation (pooling/LayerNorm in f32);
    # compare against the full-f32 HIGHEST-precision reference with bf16-appropriate tolerances.
    max_err = float(jnp.max(jnp.abs(out - ref)))
    mean_err = float(jnp.mean(jnp.abs(out - ref)))
    assert max_err < 5e-2, f"max mismatch vs reference: {max_err}"
    assert mean_err < 5e-3, f"mean mismatch vs reference: {mean_err}"
    print("KERNEL_OK")
</pallas_src>

<mosaic_0001>
module attributes {stable_mosaic.version = 11 : i64} {
  func.func @_point_block_kernel(%arg0: i32, %arg1: memref<8x8x128xbf16, #tpu.memory_space<vmem>>, %arg2: memref<8x32xf32, #tpu.memory_space<vmem>>, %arg3: memref<8x1xf32, #tpu.memory_space<vmem>>, %arg4: memref<128x64xbf16, #tpu.memory_space<vmem>>, %arg5: memref<1x64xf32, #tpu.memory_space<vmem>>, %arg6: memref<64x64xbf16, #tpu.memory_space<vmem>>, %arg7: memref<1x64xf32, #tpu.memory_space<vmem>>, %arg8: memref<64x32xbf16, #tpu.memory_space<vmem>>, %arg9: memref<1x32xf32, #tpu.memory_space<vmem>>, %arg10: memref<64x32xbf16, #tpu.memory_space<vmem>>, %arg11: memref<1x32xf32, #tpu.memory_space<vmem>>, %arg12: memref<32x32xbf16, #tpu.memory_space<vmem>>, %arg13: memref<1x32xf32, #tpu.memory_space<vmem>>, %arg14: memref<32x32xbf16, #tpu.memory_space<vmem>>, %arg15: memref<1x32xf32, #tpu.memory_space<vmem>>, %arg16: memref<1x32xf32, #tpu.memory_space<vmem>>, %arg17: memref<1x32xf32, #tpu.memory_space<vmem>>, %arg18: memref<8x32xf32, #tpu.memory_space<vmem>>) attributes {dimension_semantics = [#tpu.dimension_semantics<parallel>], iteration_bounds = array<i64: 4>, scalar_prefetch = 0 : i64, scratch_operands = 0 : i64, tpu.core_type = #tpu.core_type<tc>, window_params = [{transform_indices = @transform_0, window_bounds = array<i64: 8, 8, 128>}, {transform_indices = @transform_1, window_bounds = array<i64: 8, 32>}, {transform_indices = @transform_2, window_bounds = array<i64: 8, 1>}, {pipeline_mode = #tpu.pipeline_mode<synchronous>, transform_indices = @transform_3, window_bounds = array<i64: 128, 64>}, {pipeline_mode = #tpu.pipeline_mode<synchronous>, transform_indices = @transform_4, window_bounds = array<i64: 1, 64>}, {pipeline_mode = #tpu.pipeline_mode<synchronous>, transform_indices = @transform_5, window_bounds = array<i64: 64, 64>}, {pipeline_mode = #tpu.pipeline_mode<synchronous>, transform_indices = @transform_6, window_bounds = array<i64: 1, 64>}, {pipeline_mode = #tpu.pipeline_mode<synchronous>, transform_indices = @transform_7, window_bounds = array<i64: 64, 32>}, {pipeline_mode = #tpu.pipeline_mode<synchronous>, transform_indices = @transform_8, window_bounds = array<i64: 1, 32>}, {pipeline_mode = #tpu.pipeline_mode<synchronous>, transform_indices = @transform_9, window_bounds = array<i64: 64, 32>}, {pipeline_mode = #tpu.pipeline_mode<synchronous>, transform_indices = @transform_10, window_bounds = array<i64: 1, 32>}, {pipeline_mode = #tpu.pipeline_mode<synchronous>, transform_indices = @transform_11, window_bounds = array<i64: 32, 32>}, {pipeline_mode = #tpu.pipeline_mode<synchronous>, transform_indices = @transform_12, window_bounds = array<i64: 1, 32>}, {pipeline_mode = #tpu.pipeline_mode<synchronous>, transform_indices = @transform_13, window_bounds = array<i64: 32, 32>}, {pipeline_mode = #tpu.pipeline_mode<synchronous>, transform_indices = @transform_14, window_bounds = array<i64: 1, 32>}, {pipeline_mode = #tpu.pipeline_mode<synchronous>, transform_indices = @transform_15, window_bounds = array<i64: 1, 32>}, {pipeline_mode = #tpu.pipeline_mode<synchronous>, transform_indices = @transform_16, window_bounds = array<i64: 1, 32>}, {transform_indices = @transform_17, window_bounds = array<i64: 8, 32>}]} {
    %c0 = arith.constant 0 : index
    %c0_0 = arith.constant 0 : index
    %c0_1 = arith.constant 0 : index
    %0 = vector.load %arg1[%c0, %c0_0, %c0_1] : memref<8x8x128xbf16, #tpu.memory_space<vmem>>, vector<8x8x128xbf16>
    %1 = vector.shape_cast %0 : vector<8x8x128xbf16> to vector<64x128xbf16>
    %c0_2 = arith.constant 0 : index
    %c0_3 = arith.constant 0 : index
    %2 = vector.load %arg4[%c0_2, %c0_3] : memref<128x64xbf16, #tpu.memory_space<vmem>>, vector<128x64xbf16>
    %cst = arith.constant dense<0.000000e+00> : vector<64x64xf32>
    %3 = tpu.matmul %1, %2, %cst {dimension_numbers = #tpu.dot_dimension_numbers<[1], [0], [0], [1], [0, 0, 1, 1], [], []>} : vector<64x128xbf16>, vector<128x64xbf16>, vector<64x64xf32> -> vector<64x64xf32>
    %c0_4 = arith.constant 0 : index
    %c0_5 = arith.constant 0 : index
    %4 = vector.load %arg5[%c0_4, %c0_5] : memref<1x64xf32, #tpu.memory_space<vmem>>, vector<1x64xf32>
    %5 = vector.broadcast %4 : vector<1x64xf32> to vector<64x64xf32>
    %6 = arith.addf %3, %5 : vector<64x64xf32>
    %cst_6 = arith.constant 0.000000e+00 : f32
    %7 = vector.broadcast %cst_6 : f32 to vector<64x64xf32>
    %8 = arith.maximumf %6, %7 : vector<64x64xf32>
    %9 = arith.truncf %8 : vector<64x64xf32> to vector<64x64xbf16>
    %c0_7 = arith.constant 0 : index
    %c0_8 = arith.constant 0 : index
    %10 = vector.load %arg6[%c0_7, %c0_8] : memref<64x64xbf16, #tpu.memory_space<vmem>>, vector<64x64xbf16>
    %cst_9 = arith.constant dense<0.000000e+00> : vector<64x64xf32>
    %11 = tpu.matmul %9, %10, %cst_9 {dimension_numbers = #tpu.dot_dimension_numbers<[1], [0], [0], [1], [0, 0, 1, 1], [], []>} : vector<64x64xbf16>, vector<64x64xbf16>, vector<64x64xf32> -> vector<64x64xf32>
    %c0_10 = arith.constant 0 : index
    %c0_11 = arith.constant 0 : index
    %12 = vector.load %arg7[%c0_10, %c0_11] : memref<1x64xf32, #tpu.memory_space<vmem>>, vector<1x64xf32>
    %13 = vector.broadcast %12 : vector<1x64xf32> to vector<64x64xf32>
    %14 = arith.addf %11, %13 : vector<64x64xf32>
    %cst_12 = arith.constant 0.000000e+00 : f32
    %15 = vector.broadcast %cst_12 : f32 to vector<64x64xf32>
    %16 = arith.maximumf %14, %15 : vector<64x64xf32>
    %17 = arith.truncf %16 : vector<64x64xf32> to vector<64x64xbf16>
    %c0_13 = arith.constant 0 : index
    %c0_14 = arith.constant 0 : index
    %18 = vector.load %arg8[%c0_13, %c0_14] : memref<64x32xbf16, #tpu.memory_space<vmem>>, vector<64x32xbf16>
    %cst_15 = arith.constant dense<0.000000e+00> : vector<64x32xf32>
    %19 = tpu.matmul %17, %18, %cst_15 {dimension_numbers = #tpu.dot_dimension_numbers<[1], [0], [0], [1], [0, 0, 1, 1], [], []>} : vector<64x64xbf16>, vector<64x32xbf16>, vector<64x32xf32> -> vector<64x32xf32>
    %c0_16 = arith.constant 0 : index
    %c0_17 = arith.constant 0 : index
    %20 = vector.load %arg9[%c0_16, %c0_17] : memref<1x32xf32, #tpu.memory_space<vmem>>, vector<1x32xf32>
    %21 = vector.broadcast %20 : vector<1x32xf32> to vector<64x32xf32>
    %22 = arith.addf %19, %21 : vector<64x32xf32>
    %23 = vector.shape_cast %22 : vector<64x32xf32> to vector<8x8x32xf32>
    %cst_18 = arith.constant dense<0.000000e+00> : vector<8x32xf32>
    %24 = vector.multi_reduction <add>, %23, %cst_18 [1] : vector<8x8x32xf32> to vector<8x32xf32>
    %cst_19 = arith.constant 8.000000e+00 : f32
    %25 = vector.broadcast %cst_19 : f32 to vector<8x32xf32>
    %26 = arith.divf %24, %25 : vector<8x32xf32>
    %cst_20 = arith.constant dense<0xFF800000> : vector<8x32xf32>
    %27 = vector.multi_reduction <maximumf>, %23, %cst_20 [1] : vector<8x8x32xf32> to vector<8x32xf32>
    %28 = arith.truncf %26 : vector<8x32xf32> to vector<8x32xbf16>
    %c0_21 = arith.constant 0 : index
    %c0_22 = arith.constant 0 : index
    %29 = vector.load %arg10[%c0_21, %c0_22] : memref<64x32xbf16, #tpu.memory_space<vmem>>, vector<32x32xbf16>
    %cst_23 = arith.constant dense<0.000000e+00> : vector<8x32xf32>
    %30 = tpu.matmul %28, %29, %cst_23 {dimension_numbers = #tpu.dot_dimension_numbers<[1], [0], [0], [1], [0, 0, 1, 1], [], []>} : vector<8x32xbf16>, vector<32x32xbf16>, vector<8x32xf32> -> vector<8x32xf32>
    %31 = arith.truncf %27 : vector<8x32xf32> to vector<8x32xbf16>
    %c32 = arith.constant 32 : index
    %c0_24 = arith.constant 0 : index
    %32 = vector.load %arg10[%c32, %c0_24] : memref<64x32xbf16, #tpu.memory_space<vmem>>, vector<32x32xbf16>
    %cst_25 = arith.constant dense<0.000000e+00> : vector<8x32xf32>
    %33 = tpu.matmul %31, %32, %cst_25 {dimension_numbers = #tpu.dot_dimension_numbers<[1], [0], [0], [1], [0, 0, 1, 1], [], []>} : vector<8x32xbf16>, vector<32x32xbf16>, vector<8x32xf32> -> vector<8x32xf32>
    %34 = arith.addf %30, %33 : vector<8x32xf32>
    %c0_26 = arith.constant 0 : index
    %c0_27 = arith.constant 0 : index
    %35 = vector.load %arg11[%c0_26, %c0_27] : memref<1x32xf32, #tpu.memory_space<vmem>>, vector<1x32xf32>
    %36 = vector.broadcast %35 : vector<1x32xf32> to vector<8x32xf32>
    %37 = arith.addf %34, %36 : vector<8x32xf32>
    %cst_28 = arith.constant 0.000000e+00 : f32
    %38 = vector.broadcast %cst_28 : f32 to vector<8x32xf32>
    %39 = arith.maximumf %37, %38 : vector<8x32xf32>
    %40 = arith.truncf %39 : vector<8x32xf32> to vector<8x32xbf16>
    %c0_29 = arith.constant 0 : index
    %c0_30 = arith.constant 0 : index
    %41 = vector.load %arg12[%c0_29, %c0_30] : memref<32x32xbf16, #tpu.memory_space<vmem>>, vector<32x32xbf16>
    %cst_31 = arith.constant dense<0.000000e+00> : vector<8x32xf32>
    %42 = tpu.matmul %40, %41, %cst_31 {dimension_numbers = #tpu.dot_dimension_numbers<[1], [0], [0], [1], [0, 0, 1, 1], [], []>} : vector<8x32xbf16>, vector<32x32xbf16>, vector<8x32xf32> -> vector<8x32xf32>
    %c0_32 = arith.constant 0 : index
    %c0_33 = arith.constant 0 : index
    %43 = vector.load %arg13[%c0_32, %c0_33] : memref<1x32xf32, #tpu.memory_space<vmem>>, vector<1x32xf32>
    %44 = vector.broadcast %43 : vector<1x32xf32> to vector<8x32xf32>
    %45 = arith.addf %42, %44 : vector<8x32xf32>
    %cst_34 = arith.constant 0.000000e+00 : f32
    %46 = vector.broadcast %cst_34 : f32 to vector<8x32xf32>
    %47 = arith.maximumf %45, %46 : vector<8x32xf32>
    %48 = arith.truncf %47 : vector<8x32xf32> to vector<8x32xbf16>
    %c0_35 = arith.constant 0 : index
    %c0_36 = arith.constant 0 : index
    %49 = vector.load %arg14[%c0_35, %c0_36] : memref<32x32xbf16, #tpu.memory_space<vmem>>, vector<32x32xbf16>
    %cst_37 = arith.constant dense<0.000000e+00> : vector<8x32xf32>
    %50 = tpu.matmul %48, %49, %cst_37 {dimension_numbers = #tpu.dot_dimension_numbers<[1], [0], [0], [1], [0, 0, 1, 1], [], []>} : vector<8x32xbf16>, vector<32x32xbf16>, vector<8x32xf32> -> vector<8x32xf32>
    %c0_38 = arith.constant 0 : index
    %c0_39 = arith.constant 0 : index
    %51 = vector.load %arg15[%c0_38, %c0_39] : memref<1x32xf32, #tpu.memory_space<vmem>>, vector<1x32xf32>
    %52 = vector.broadcast %51 : vector<1x32xf32> to vector<8x32xf32>
    %53 = arith.addf %50, %52 : vector<8x32xf32>
    %c0_40 = arith.constant 0 : index
    %c0_41 = arith.constant 0 : index
    %54 = vector.load %arg2[%c0_40, %c0_41] : memref<8x32xf32, #tpu.memory_space<vmem>>, vector<8x32xf32>
    %55 = arith.addf %54, %53 : vector<8x32xf32>
    %cst_42 = arith.constant dense<0.000000e+00> : vector<8xf32>
    %56 = vector.multi_reduction <add>, %55, %cst_42 [1] : vector<8x32xf32> to vector<8xf32>
    %57 = vector.shape_cast %56 : vector<8xf32> to vector<8x1xf32>
    %cst_43 = arith.constant 3.200000e+01 : f32
    %58 = vector.broadcast %cst_43 : f32 to vector<8x1xf32>
    %59 = arith.divf %57, %58 : vector<8x1xf32>
    %60 = vector.broadcast %59 : vector<8x1xf32> to vector<8x32xf32>
    %61 = arith.subf %55, %60 : vector<8x32xf32>
    %62 = arith.mulf %61, %61 : vector<8x32xf32>
    %cst_44 = arith.constant dense<0.000000e+00> : vector<8xf32>
    %63 = vector.multi_reduction <add>, %62, %cst_44 [1] : vector<8x32xf32> to vector<8xf32>
    %64 = vector.shape_cast %63 : vector<8xf32> to vector<8x1xf32>
    %cst_45 = arith.constant 3.200000e+01 : f32
    %65 = vector.broadcast %cst_45 : f32 to vector<8x1xf32>
    %66 = arith.divf %64, %65 : vector<8x1xf32>
    %67 = vector.broadcast %59 : vector<8x1xf32> to vector<8x32xf32>
    %68 = arith.subf %55, %67 : vector<8x32xf32>
    %cst_46 = arith.constant 9.99999974E-6 : f32
    %69 = vector.broadcast %cst_46 : f32 to vector<8x1xf32>
    %70 = arith.addf %66, %69 : vector<8x1xf32>
    %71 = math.rsqrt %70 : vector<8x1xf32>
    %72 = vector.broadcast %71 : vector<8x1xf32> to vector<8x32xf32>
    %73 = arith.mulf %68, %72 : vector<8x32xf32>
    %c0_47 = arith.constant 0 : index
    %c0_48 = arith.constant 0 : index
    %74 = vector.load %arg16[%c0_47, %c0_48] : memref<1x32xf32, #tpu.memory_space<vmem>>, vector<1x32xf32>
    %75 = vector.broadcast %74 : vector<1x32xf32> to vector<8x32xf32>
    %76 = arith.mulf %73, %75 : vector<8x32xf32>
    %c0_49 = arith.constant 0 : index
    %c0_50 = arith.constant 0 : index
    %77 = vector.load %arg17[%c0_49, %c0_50] : memref<1x32xf32, #tpu.memory_space<vmem>>, vector<1x32xf32>
    %78 = vector.broadcast %77 : vector<1x32xf32> to vector<8x32xf32>
    %79 = arith.addf %76, %78 : vector<8x32xf32>
    %c0_51 = arith.constant 0 : index
    %c0_52 = arith.constant 0 : index
    %80 = vector.load %arg3[%c0_51, %c0_52] : memref<8x1xf32, #tpu.memory_space<vmem>>, vector<8x1xf32>
    %81 = vector.broadcast %80 : vector<8x1xf32> to vector<8x32xf32>
    %82 = arith.mulf %79, %81 : vector<8x32xf32>
    %c0_53 = arith.constant 0 : index
    %c0_54 = arith.constant 0 : index
    %83 = vector.load %arg18[%c0_53, %c0_54] : memref<8x32xf32, #tpu.memory_space<vmem>>, vector<8x32xf32>
    tpu.vector_store %arg18[%c0_53, %c0_54], %82 {strides = array<i32>} : memref<8x32xf32, #tpu.memory_space<vmem>>, vector<8x32xf32>,
    return
  }
  func.func @transform_0(%arg0: i32) -> (i32, i32, i32) {
    %c0_i32 = arith.constant 0 : i32
    %c0_i32_0 = arith.constant 0 : i32
    %c0_i32_1 = arith.constant 0 : i32
    return %arg0, %c0_i32, %c0_i32_0 : i32, i32, i32
  }
  func.func @transform_1(%arg0: i32) -> (i32, i32) {
    %c0_i32 = arith.constant 0 : i32
    %c0_i32_0 = arith.constant 0 : i32
    return %arg0, %c0_i32 : i32, i32
  }
  func.func @transform_2(%arg0: i32) -> (i32, i32) {
    %c0_i32 = arith.constant 0 : i32
    %c0_i32_0 = arith.constant 0 : i32
    return %arg0, %c0_i32 : i32, i32
  }
  func.func @transform_3(%arg0: i32) -> (i32, i32) {
    %c0_i32 = arith.constant 0 : i32
    %c0_i32_0 = arith.constant 0 : i32
    %c0_i32_1 = arith.constant 0 : i32
    return %c0_i32, %c0_i32_0 : i32, i32
  }
  func.func @transform_4(%arg0: i32) -> (i32, i32) {
    %c0_i32 = arith.constant 0 : i32
    %c0_i32_0 = arith.constant 0 : i32
    %c0_i32_1 = arith.constant 0 : i32
    return %c0_i32, %c0_i32_0 : i32, i32
  }
  func.func @transform_5(%arg0: i32) -> (i32, i32) {
    %c0_i32 = arith.constant 0 : i32
    %c0_i32_0 = arith.constant 0 : i32
    %c0_i32_1 = arith.constant 0 : i32
    return %c0_i32, %c0_i32_0 : i32, i32
  }
  func.func @transform_6(%arg0: i32) -> (i32, i32) {
    %c0_i32 = arith.constant 0 : i32
    %c0_i32_0 = arith.constant 0 : i32
    %c0_i32_1 = arith.constant 0 : i32
    return %c0_i32, %c0_i32_0 : i32, i32
  }
  func.func @transform_7(%arg0: i32) -> (i32, i32) {
    %c0_i32 = arith.constant 0 : i32
    %c0_i32_0 = arith.constant 0 : i32
    %c0_i32_1 = arith.constant 0 : i32
    return %c0_i32, %c0_i32_0 : i32, i32
  }
  func.func @transform_8(%arg0: i32) -> (i32, i32) {
    %c0_i32 = arith.constant 0 : i32
    %c0_i32_0 = arith.constant 0 : i32
    %c0_i32_1 = arith.constant 0 : i32
    return %c0_i32, %c0_i32_0 : i32, i32
  }
  func.func @transform_9(%arg0: i32) -> (i32, i32) {
    %c0_i32 = arith.constant 0 : i32
    %c0_i32_0 = arith.constant 0 : i32
    %c0_i32_1 = arith.constant 0 : i32
    return %c0_i32, %c0_i32_0 : i32, i32
  }
  func.func @transform_10(%arg0: i32) -> (i32, i32) {
    %c0_i32 = arith.constant 0 : i32
    %c0_i32_0 = arith.constant 0 : i32
    %c0_i32_1 = arith.constant 0 : i32
    return %c0_i32, %c0_i32_0 : i32, i32
  }
  func.func @transform_11(%arg0: i32) -> (i32, i32) {
    %c0_i32 = arith.constant 0 : i32
    %c0_i32_0 = arith.constant 0 : i32
    %c0_i32_1 = arith.constant 0 : i32
    return %c0_i32, %c0_i32_0 : i32, i32
  }
  func.func @transform_12(%arg0: i32) -> (i32, i32) {
    %c0_i32 = arith.constant 0 : i32
    %c0_i32_0 = arith.constant 0 : i32
    %c0_i32_1 = arith.constant 0 : i32
    return %c0_i32, %c0_i32_0 : i32, i32
  }
  func.func @transform_13(%arg0: i32) -> (i32, i32) {
    %c0_i32 = arith.constant 0 : i32
    %c0_i32_0 = arith.constant 0 : i32
    %c0_i32_1 = arith.constant 0 : i32
    return %c0_i32, %c0_i32_0 : i32, i32
  }
  func.func @transform_14(%arg0: i32) -> (i32, i32) {
    %c0_i32 = arith.constant 0 : i32
    %c0_i32_0 = arith.constant 0 : i32
    %c0_i32_1 = arith.constant 0 : i32
    return %c0_i32, %c0_i32_0 : i32, i32
  }
  func.func @transform_15(%arg0: i32) -> (i32, i32) {
    %c0_i32 = arith.constant 0 : i32
    %c0_i32_0 = arith.constant 0 : i32
    %c0_i32_1 = arith.constant 0 : i32
    return %c0_i32, %c0_i32_0 : i32, i32
  }
  func.func @transform_16(%arg0: i32) -> (i32, i32) {
    %c0_i32 = arith.constant 0 : i32
    %c0_i32_0 = arith.constant 0 : i32
    %c0_i32_1 = arith.constant 0 : i32
    return %c0_i32, %c0_i32_0 : i32, i32
  }
  func.func @transform_17(%arg0: i32) -> (i32, i32) {
    %c0_i32 = arith.constant 0 : i32
    %c0_i32_0 = arith.constant 0 : i32
    return %arg0, %c0_i32 : i32, i32
  }
}

</mosaic_0001>

<llo_original>
// kernel: squeeze.6
$region0: #{squeeze.6}
  %s0 = inlined_call_operand.vmem [shape: f32[2,16,1], index: 0, kind: input, shape index: {}]
  %s1 = inlined_call_operand.vmem [shape: f32[32,1], index: 1, kind: output, shape index: {}]
  $region1: #{squeeze.6} parent=0
    #allocation0 [shape = 'u8[4096]{0}', space=vmem, size = 0x1000, scoped, tag = 'scoped mem for input reshape']
    %s3 = sshll.u32 1, 2
    %s4 = ssub.s32 %s3, 1
    %v5 = vld [vmem:[%s0] sm:%s4]
    %6 = vst [vmem:[#allocation0] sm:%s4] %v5
    %v7 = vld [vmem:[#allocation0] sm:$0x3]
    %vm8 = vcmask 7168
    %9 = vst.msk [vmem:[%s1] ss:$16 sm:$0x3] %vm8, %v7
    %v10 = vld [vmem:[#allocation0] sm:$0x3]
    %11 = vrot.lane.b32.xlu0 %v10, 127
    %v12 = vpop.permute.xlu0 %11
    %vm13 = vcmask 7168
    %s14 = scalar_lea.vmem %s1, 1
    %15 = vst.msk [vmem:[%s14] ss:$16 sm:$0x3] %vm13, %v12
    %v16 = vld [vmem:[#allocation0] sm:$0x3]
    %17 = vrot.lane.b32.xlu0 %v16, 126
    %v18 = vpop.permute.xlu0 %17
    %vm19 = vcmask 7168
    %s20 = scalar_lea.vmem %s1, 2
    %21 = vst.msk [vmem:[%s20] ss:$16 sm:$0x3] %vm19, %v18
    %v22 = vld [vmem:[#allocation0] sm:$0x3]
    %23 = vrot.lane.b32.xlu0 %v22, 125
    %v24 = vpop.permute.xlu0 %23
    %vm25 = vcmask 7168
    %s26 = scalar_lea.vmem %s1, 3
    %27 = vst.msk [vmem:[%s26] ss:$16 sm:$0x3] %vm25, %v24
    %v28 = vld [vmem:[#allocation0] sm:$0x3]
    %29 = vrot.lane.b32.xlu0 %v28, 124
    %v30 = vpop.permute.xlu0 %29
    %vm31 = vcmask 7168
    %s32 = scalar_lea.vmem %s1, 4
    %33 = vst.msk [vmem:[%s32] ss:$16 sm:$0x3] %vm31, %v30
    %v34 = vld [vmem:[#allocation0] sm:$0x3]
    %35 = vrot.lane.b32.xlu0 %v34, 123
    %v36 = vpop.permute.xlu0 %35
    %vm37 = vcmask 7168
    %s38 = scalar_lea.vmem %s1, 5
    %39 = vst.msk [vmem:[%s38] ss:$16 sm:$0x3] %vm37, %v36
    %v40 = vld [vmem:[#allocation0] sm:$0x3]
    %41 = vrot.lane.b32.xlu0 %v40, 122
    %v42 = vpop.permute.xlu0 %41
    %vm43 = vcmask 7168
    %s44 = scalar_lea.vmem %s1, 6
    %45 = vst.msk [vmem:[%s44] ss:$16 sm:$0x3] %vm43, %v42
    %v46 = vld [vmem:[#allocation0] sm:$0x3]
    %47 = vrot.lane.b32.xlu0 %v46, 121
    %v48 = vpop.permute.xlu0 %47
    %vm49 = vcmask 7168
    %s50 = scalar_lea.vmem %s1, 7
    %51 = vst.msk [vmem:[%s50] ss:$16 sm:$0x3] %vm49, %v48
    %v52 = vld [vmem:[#allocation0] sm:$0x3]
    %53 = vrot.lane.b32.xlu0 %v52, 120
    %v54 = vpop.permute.xlu0 %53
    %vm55 = vcmask 7168
    %s56 = scalar_lea.vmem %s1, 8
    %57 = vst.msk [vmem:[%s56] ss:$16 sm:$0x3] %vm55, %v54
    %v58 = vld [vmem:[#allocation0] sm:$0x3]
    %59 = vrot.lane.b32.xlu0 %v58, 119
    %v60 = vpop.permute.xlu0 %59
    %vm61 = vcmask 7168
    %s62 = scalar_lea.vmem %s1, 9
    %63 = vst.msk [vmem:[%s62] ss:$16 sm:$0x3] %vm61, %v60
    %v64 = vld [vmem:[#allocation0] sm:$0x3]
    %65 = vrot.lane.b32.xlu0 %v64, 118
    %v66 = vpop.permute.xlu0 %65
    %vm67 = vcmask 7168
    %s68 = scalar_lea.vmem %s1, 10
    %69 = vst.msk [vmem:[%s68] ss:$16 sm:$0x3] %vm67, %v66
    %v70 = vld [vmem:[#allocation0] sm:$0x3]
    %71 = vrot.lane.b32.xlu0 %v70, 117
    %v72 = vpop.permute.xlu0 %71
    %vm73 = vcmask 7168
    %s74 = scalar_lea.vmem %s1, 11
    %75 = vst.msk [vmem:[%s74] ss:$16 sm:$0x3] %vm73, %v72
    %v76 = vld [vmem:[#allocation0] sm:$0x3]
    %77 = vrot.lane.b32.xlu0 %v76, 116
    %v78 = vpop.permute.xlu0 %77
    %vm79 = vcmask 7168
    %s80 = scalar_lea.vmem %s1, 12
    %81 = vst.msk [vmem:[%s80] ss:$16 sm:$0x3] %vm79, %v78
    %v82 = vld [vmem:[#allocation0] sm:$0x3]
    %83 = vrot.lane.b32.xlu0 %v82, 115
    %v84 = vpop.permute.xlu0 %83
    %vm85 = vcmask 7168
    %s86 = scalar_lea.vmem %s1, 13
    %87 = vst.msk [vmem:[%s86] ss:$16 sm:$0x3] %vm85, %v84
    %v88 = vld [vmem:[#allocation0] sm:$0x3]
    %89 = vrot.lane.b32.xlu0 %v88, 114
    %v90 = vpop.permute.xlu0 %89
    %vm91 = vcmask 7168
    %s92 = scalar_lea.vmem %s1, 14
    %93 = vst.msk [vmem:[%s92] ss:$16 sm:$0x3] %vm91, %v90
    %v94 = vld [vmem:[#allocation0] sm:$0x3]
    %95 = vrot.lane.b32.xlu0 %v94, 113
    %v96 = vpop.permute.xlu0 %95
    %vm97 = vcmask 7168
    %s98 = scalar_lea.vmem %s1, 15
    %99 = vst.msk [vmem:[%s98] ss:$16 sm:$0x3] %vm97, %v96

// kernel: point_encoding_forward.1
$region0: #{point_encoding_forward.1}
  #allocation0 [shape = 'u32[]', space=smem, size = 0x4, offset = 0x4, fixed_abs, tag = 'smem constant byte address 0x4 - core index']
  #allocation1 [shape = 'u32[144,128]{1,0:T(1,128)}', space=vmem, size = 0x12000, scoped, tag = 'internal scratch']
  %s0 = inlined_call_operand.vmem [shape: bf16[32,8,128], index: 0, kind: input, shape index: {}]
  %s1 = inlined_call_operand.vmem [shape: f32[32,32], index: 1, kind: input, shape index: {}]
  %s2 = inlined_call_operand.vmem [shape: f32[32,1], index: 2, kind: input, shape index: {}]
  %s3 = inlined_call_operand.vmem [shape: bf16[128,64], index: 3, kind: input, shape index: {}]
  %s4 = inlined_call_operand.vmem [shape: f32[1,64], index: 4, kind: input, shape index: {}]
  %s5 = inlined_call_operand.vmem [shape: bf16[64,64], index: 5, kind: input, shape index: {}]
  %s6 = inlined_call_operand.vmem [shape: f32[1,64], index: 6, kind: input, shape index: {}]
  %s7 = inlined_call_operand.vmem [shape: bf16[64,32], index: 7, kind: input, shape index: {}]
  %s8 = inlined_call_operand.vmem [shape: f32[1,32], index: 8, kind: input, shape index: {}]
  %s9 = inlined_call_operand.vmem [shape: bf16[64,32], index: 9, kind: input, shape index: {}]
  %s10 = inlined_call_operand.vmem [shape: f32[1,32], index: 10, kind: input, shape index: {}]
  %s11 = inlined_call_operand.vmem [shape: bf16[32,32], index: 11, kind: input, shape index: {}]
  %s12 = inlined_call_operand.vmem [shape: f32[1,32], index: 12, kind: input, shape index: {}]
  %s13 = inlined_call_operand.vmem [shape: bf16[32,32], index: 13, kind: input, shape index: {}]
  %s14 = inlined_call_operand.vmem [shape: f32[1,32], index: 14, kind: input, shape index: {}]
  %s15 = inlined_call_operand.vmem [shape: f32[1,32], index: 15, kind: input, shape index: {}]
  %s16 = inlined_call_operand.vmem [shape: f32[1,32], index: 16, kind: input, shape index: {}]
  %s17 = inlined_call_operand.hbm [shape: f32[32,32], index: 17, kind: output, shape index: {}]
  %s18 = sld [smem:[#allocation0]]
  $region101: #{point_encoding_forward.1} parent=0
    _
  %s20 = ssub.s32 1, %s18
  %s21 = scalar_select 0, %s20, %s18
  $region1: #{point_encoding_forward.1} parent=0
    #allocation2 [shape = 'u8[8192]{0}', space=vmem, size = 0x2000, scoped, tag = 'output window, operand 0']
    #allocation3 [shape = 's32[2]{0}', space=sflag, size = 0x8, scoped, tag = 'scoped memory for point_encoding_forward.1']
    %22 = vsyncpa [#allocation3], 0
    %s23 = scalar_lea.sflag [#allocation3], 1
    %24 = vsyncpa %s23, 0
    loop: start=0, step=1, limit=6
    $region2: #{point_encoding_forward.1} parent=1 // loop_pre_header
      _
    $region3: #{point_encoding_forward.1} parent=1 // loop_header
      %s26 = sphi 0, %s30
      %p27 = scmp.ge.s32.totalorder %s26, 6
      %s36 = sphi 0, %s38
      %s39 = sphi 0, %s36
      %s40 = sphi 0, %s39
      %s56 = sphi 0, %s40
      %s62 = sphi 0, %s64
      %s65 = sphi 0, %s62
      %s66 = sphi 0, %s65
      %s82 = sphi 0, %s66
      %s88 = sphi 0, %s90
      %s91 = sphi 0, %s88
      %s92 = sphi 0, %s91
      %s108 = sphi 0, %s92
      %s112 = sphi 0, %s112
      %s114 = sphi 0, %s112
      %s115 = sphi 0, %s114
      %s129 = sphi 0, %s115
      %s133 = sphi 0, %s133
      %s135 = sphi 0, %s133
      %s136 = sphi 0, %s135
      %s150 = sphi 0, %s136
      %s154 = sphi 0, %s154
      %s156 = sphi 0, %s154
      %s157 = sphi 0, %s156
      %s171 = sphi 0, %s157
      %s175 = sphi 0, %s175
      %s177 = sphi 0, %s175
      %s178 = sphi 0, %s177
      %s192 = sphi 0, %s178
      %s196 = sphi 0, %s196
      %s198 = sphi 0, %s196
      %s199 = sphi 0, %s198
      %s213 = sphi 0, %s199
      %s217 = sphi 0, %s217
      %s219 = sphi 0, %s217
      %s220 = sphi 0, %s219
      %s234 = sphi 0, %s220
      %s238 = sphi 0, %s238
      %s240 = sphi 0, %s238
      %s241 = sphi 0, %s240
      %s255 = sphi 0, %s241
      %s259 = sphi 0, %s259
      %s261 = sphi 0, %s259
      %s262 = sphi 0, %s261
      %s276 = sphi 0, %s262
      %s280 = sphi 0, %s280
      %s282 = sphi 0, %s280
      %s283 = sphi 0, %s282
      %s297 = sphi 0, %s283
      %s301 = sphi 0, %s301
      %s303 = sphi 0, %s301
      %s304 = sphi 0, %s303
      %s318 = sphi 0, %s304
      %s322 = sphi 0, %s322
      %s324 = sphi 0, %s322
      %s325 = sphi 0, %s324
      %s339 = sphi 0, %s325
      %s343 = sphi 0, %s343
      %s345 = sphi 0, %s343
      %s346 = sphi 0, %s345
      %s360 = sphi 0, %s346
      %s364 = sphi 0, %s364
      %s366 = sphi 0, %s364
      %s367 = sphi 0, %s366
      %s381 = sphi 0, %s367
      %s385 = sphi 0, %s385
      %s387 = sphi 0, %s385
      %s388 = sphi 0, %s387
      %s402 = sphi 0, %s388
      %s408 = sphi 0, %s410
      %s411 = sphi 0, %s408
      %s412 = sphi 0, %s411
      %s428 = sphi 0, %s412
    $region4: #{point_encoding_forward.1} parent=1 // loop_header_branch
      %29 = sbr.rel (%p27) target = $region8
    $region5: #{point_encoding_forward.1} parent=1 // loop_body
      %s31 = ssub.s32 %s26, 1
      %s32 = ssub.s32 %s26, 2
      %s33 = sadd.s32 %s26, 1
      %s34 = ssub.s32 %s26, %s33
      %p35 = scmp.eq.s32.totalorder %s34, 0
      %s37 = sadd.s32 %s36, 1
      %s38 = scalar_select %p35, %s36, %s37
      %p41 = pneg %p35
      %p42 = scmp.eq.s32.totalorder %s26, 3
      %p43 = por %p41, %p42
      %p44 = scmp.ne.s32.totalorder %s36, %s39
      %p45 = scmp.eq.s32.totalorder %s26, 0
      %p46 = por %p44, %p45
      %p47 = scmp.ne.s32.totalorder %s36, %s39
      %p48 = scmp.eq.s32.totalorder %s31, 3
      %p49 = por %p47, %p48
      %p50 = scmp.ne.s32.totalorder %s39, %s40
      %p51 = scmp.eq.s32.totalorder %s31, 0
      %p52 = por %p50, %p51
      %p53 = scmp.ne.s32.totalorder %s39, %s40
      %p54 = scmp.eq.s32.totalorder %s32, 3
      %p55 = por %p53, %p54
      %p57 = scmp.ne.s32.totalorder %s40, %s56
      %p58 = scmp.eq.s32.totalorder %s32, 0
      %p59 = por %p57, %p58
      %s60 = ssub.s32 %s26, %s33
      %p61 = scmp.eq.s32.totalorder %s60, 0
      %s63 = sadd.s32 %s62, 1
      %s64 = scalar_select %p61, %s62, %s63
      %p67 = pneg %p61
      %p68 = scmp.eq.s32.totalorder %s26, 3
      %p69 = por %p67, %p68
      %p70 = scmp.ne.s32.totalorder %s62, %s65
      %p71 = scmp.eq.s32.totalorder %s26, 0
      %p72 = por %p70, %p71
      %p73 = scmp.ne.s32.totalorder %s62, %s65
      %p74 = scmp.eq.s32.totalorder %s31, 3
      %p75 = por %p73, %p74
      %p76 = scmp.ne.s32.totalorder %s65, %s66
      %p77 = scmp.eq.s32.totalorder %s31, 0
      %p78 = por %p76, %p77
      %p79 = scmp.ne.s32.totalorder %s65, %s66
      %p80 = scmp.eq.s32.totalorder %s32, 3
      %p81 = por %p79, %p80
      %p83 = scmp.ne.s32.totalorder %s66, %s82
      %p84 = scmp.eq.s32.totalorder %s32, 0
      %p85 = por %p83, %p84
      %s86 = ssub.s32 %s26, %s33
      %p87 = scmp.eq.s32.totalorder %s86, 0
      %s89 = sadd.s32 %s88, 1
      %s90 = scalar_select %p87, %s88, %s89
      %p93 = pneg %p87
      %p94 = scmp.eq.s32.totalorder %s26, 3
      %p95 = por %p93, %p94
      %p96 = scmp.ne.s32.totalorder %s88, %s91
      %p97 = scmp.eq.s32.totalorder %s26, 0
      %p98 = por %p96, %p97
      %p99 = scmp.ne.s32.totalorder %s88, %s91
      %p100 = scmp.eq.s32.totalorder %s31, 3
      %p101 = por %p99, %p100
      %p102 = scmp.ne.s32.totalorder %s91, %s92
      %p103 = scmp.eq.s32.totalorder %s31, 0
      %p104 = por %p102, %p103
      %p105 = scmp.ne.s32.totalorder %s91, %s92
      %p106 = scmp.eq.s32.totalorder %s32, 3
      %p107 = por %p105, %p106
      %p109 = scmp.ne.s32.totalorder %s92, %s108
      %p110 = scmp.eq.s32.totalorder %s32, 0
      %p111 = por %p109, %p110
      %s113 = sadd.s32 %s112, 1
      %p116 = scmp.eq.s32.totalorder %s26, 3
      %p117 = scmp.ne.s32.totalorder %s112, %s114
      %p118 = scmp.eq.s32.totalorder %s26, 0
      %p119 = por %p117, %p118
      %p120 = scmp.ne.s32.totalorder %s112, %s114
      %p121 = scmp.eq.s32.totalorder %s31, 3
      %p122 = por %p120, %p121
      %p123 = scmp.ne.s32.totalorder %s114, %s115
      %p124 = scmp.eq.s32.totalorder %s31, 0
      %p125 = por %p123, %p124
      %p126 = scmp.ne.s32.totalorder %s114, %s115
      %p127 = scmp.eq.s32.totalorder %s32, 3
      %p128 = por %p126, %p127
      %p130 = scmp.ne.s32.totalorder %s115, %s129
      %p131 = scmp.eq.s32.totalorder %s32, 0
      %p132 = por %p130, %p131
      %s134 = sadd.s32 %s133, 1
      %p137 = scmp.eq.s32.totalorder %s26, 3
      %p138 = scmp.ne.s32.totalorder %s133, %s135
      %p139 = scmp.eq.s32.totalorder %s26, 0
      %p140 = por %p138, %p139
      %p141 = scmp.ne.s32.totalorder %s133, %s135
      %p142 = scmp.eq.s32.totalorder %s31, 3
      %p143 = por %p141, %p142
      %p144 = scmp.ne.s32.totalorder %s135, %s136
      %p145 = scmp.eq.s32.totalorder %s31, 0
      %p146 = por %p144, %p145
      %p147 = scmp.ne.s32.totalorder %s135, %s136
      %p148 = scmp.eq.s32.totalorder %s32, 3
      %p149 = por %p147, %p148
      %p151 = scmp.ne.s32.totalorder %s136, %s150
      %p152 = scmp.eq.s32.totalorder %s32, 0
      %p153 = por %p151, %p152
      %s155 = sadd.s32 %s154, 1
      %p158 = scmp.eq.s32.totalorder %s26, 3
      %p159 = scmp.ne.s32.totalorder %s154, %s156
      %p160 = scmp.eq.s32.totalorder %s26, 0
      %p161 = por %p159, %p160
      %p162 = scmp.ne.s32.totalorder %s154, %s156
      %p163 = scmp.eq.s32.totalorder %s31, 3
      %p164 = por %p162, %p163
      %p165 = scmp.ne.s32.totalorder %s156, %s157
      %p166 = scmp.eq.s32.totalorder %s31, 0
      %p167 = por %p165, %p166
      %p168 = scmp.ne.s32.totalorder %s156, %s157
      %p169 = scmp.eq.s32.totalorder %s32, 3
      %p170 = por %p168, %p169
      %p172 = scmp.ne.s32.totalorder %s157, %s171
      %p173 = scmp.eq.s32.totalorder %s32, 0
      %p174 = por %p172, %p173
      %s176 = sadd.s32 %s175, 1
      %p179 = scmp.eq.s32.totalorder %s26, 3
      %p180 = scmp.ne.s32.totalorder %s175, %s177
      %p181 = scmp.eq.s32.totalorder %s26, 0
      %p182 = por %p180, %p181
      %p183 = scmp.ne.s32.totalorder %s175, %s177
      %p184 = scmp.eq.s32.totalorder %s31, 3
      %p185 = por %p183, %p184
      %p186 = scmp.ne.s32.totalorder %s177, %s178
      %p187 = scmp.eq.s32.totalorder %s31, 0
      %p188 = por %p186, %p187
      %p189 = scmp.ne.s32.totalorder %s177, %s178
      %p190 = scmp.eq.s32.totalorder %s32, 3
      %p191 = por %p189, %p190
      %p193 = scmp.ne.s32.totalorder %s178, %s192
      %p194 = scmp.eq.s32.totalorder %s32, 0
      %p195 = por %p193, %p194
      %s197 = sadd.s32 %s196, 1
      %p200 = scmp.eq.s32.totalorder %s26, 3
      %p201 = scmp.ne.s32.totalorder %s196, %s198
      %p202 = scmp.eq.s32.totalorder %s26, 0
      %p203 = por %p201, %p202
      %p204 = scmp.ne.s32.totalorder %s196, %s198
      %p205 = scmp.eq.s32.totalorder %s31, 3
      %p206 = por %p204, %p205
      %p207 = scmp.ne.s32.totalorder %s198, %s199
      %p208 = scmp.eq.s32.totalorder %s31, 0
      %p209 = por %p207, %p208
      %p210 = scmp.ne.s32.totalorder %s198, %s199
      %p211 = scmp.eq.s32.totalorder %s32, 3
      %p212 = por %p210, %p211
      %p214 = scmp.ne.s32.totalorder %s199, %s213
      %p215 = scmp.eq.s32.totalorder %s32, 0
      %p216 = por %p214, %p215
      %s218 = sadd.s32 %s217, 1
      %p221 = scmp.eq.s32.totalorder %s26, 3
      %p222 = scmp.ne.s32.totalorder %s217, %s219
      %p223 = scmp.eq.s32.totalorder %s26, 0
      %p224 = por %p222, %p223
      %p225 = scmp.ne.s32.totalorder %s217, %s219
      %p226 = scmp.eq.s32.totalorder %s31, 3
      %p227 = por %p225, %p226
      %p228 = scmp.ne.s32.totalorder %s219, %s220
      %p229 = scmp.eq.s32.totalorder %s31, 0
      %p230 = por %p228, %p229
      %p231 = scmp.ne.s32.totalorder %s219, %s220
      %p232 = scmp.eq.s32.totalorder %s32, 3
      %p233 = por %p231, %p232
      %p235 = scmp.ne.s32.totalorder %s220, %s234
      %p236 = scmp.eq.s32.totalorder %s32, 0
      %p237 = por %p235, %p236
      %s239 = sadd.s32 %s238, 1
      %p242 = scmp.eq.s32.totalorder %s26, 3
      %p243 = scmp.ne.s32.totalorder %s238, %s240
      %p244 = scmp.eq.s32.totalorder %s26, 0
      %p245 = por %p243, %p244
      %p246 = scmp.ne.s32.totalorder %s238, %s240
      %p247 = scmp.eq.s32.totalorder %s31, 3
      %p248 = por %p246, %p247
      %p249 = scmp.ne.s32.totalorder %s240, %s241
      %p250 = scmp.eq.s32.totalorder %s31, 0
      %p251 = por %p249, %p250
      %p252 = scmp.ne.s32.totalorder %s240, %s241
      %p253 = scmp.eq.s32.totalorder %s32, 3
      %p254 = por %p252, %p253
      %p256 = scmp.ne.s32.totalorder %s241, %s255
      %p257 = scmp.eq.s32.totalorder %s32, 0
      %p258 = por %p256, %p257
      %s260 = sadd.s32 %s259, 1
      %p263 = scmp.eq.s32.totalorder %s26, 3
      %p264 = scmp.ne.s32.totalorder %s259, %s261
      %p265 = scmp.eq.s32.totalorder %s26, 0
      %p266 = por %p264, %p265
      %p267 = scmp.ne.s32.totalorder %s259, %s261
      %p268 = scmp.eq.s32.totalorder %s31, 3
      %p269 = por %p267, %p268
      %p270 = scmp.ne.s32.totalorder %s261, %s262
      %p271 = scmp.eq.s32.totalorder %s31, 0
      %p272 = por %p270, %p271
      %p273 = scmp.ne.s32.totalorder %s261, %s262
      %p274 = scmp.eq.s32.totalorder %s32, 3
      %p275 = por %p273, %p274
      %p277 = scmp.ne.s32.totalorder %s262, %s276
      %p278 = scmp.eq.s32.totalorder %s32, 0
      %p279 = por %p277, %p278
      %s281 = sadd.s32 %s280, 1
      %p284 = scmp.eq.s32.totalorder %s26, 3
      %p285 = scmp.ne.s32.totalorder %s280, %s282
      %p286 = scmp.eq.s32.totalorder %s26, 0
      %p287 = por %p285, %p286
      %p288 = scmp.ne.s32.totalorder %s280, %s282
      %p289 = scmp.eq.s32.totalorder %s31, 3
      %p290 = por %p288, %p289
      %p291 = scmp.ne.s32.totalorder %s282, %s283
      %p292 = scmp.eq.s32.totalorder %s31, 0
      %p293 = por %p291, %p292
      %p294 = scmp.ne.s32.totalorder %s282, %s283
      %p295 = scmp.eq.s32.totalorder %s32, 3
      %p296 = por %p294, %p295
      %p298 = scmp.ne.s32.totalorder %s283, %s297
      %p299 = scmp.eq.s32.totalorder %s32, 0
      %p300 = por %p298, %p299
      %s302 = sadd.s32 %s301, 1
      %p305 = scmp.eq.s32.totalorder %s26, 3
      %p306 = scmp.ne.s32.totalorder %s301, %s303
      %p307 = scmp.eq.s32.totalorder %s26, 0
      %p308 = por %p306, %p307
      %p309 = scmp.ne.s32.totalorder %s301, %s303
      %p310 = scmp.eq.s32.totalorder %s31, 3
      %p311 = por %p309, %p310
      %p312 = scmp.ne.s32.totalorder %s303, %s304
      %p313 = scmp.eq.s32.totalorder %s31, 0
      %p314 = por %p312, %p313
      %p315 = scmp.ne.s32.totalorder %s303, %s304
      %p316 = scmp.eq.s32.totalorder %s32, 3
      %p317 = por %p315, %p316
      %p319 = scmp.ne.s32.totalorder %s304, %s318
      %p320 = scmp.eq.s32.totalorder %s32, 0
      %p321 = por %p319, %p320
      %s323 = sadd.s32 %s322, 1
      %p326 = scmp.eq.s32.totalorder %s26, 3
      %p327 = scmp.ne.s32.totalorder %s322, %s324
      %p328 = scmp.eq.s32.totalorder %s26, 0
      %p329 = por %p327, %p328
      %p330 = scmp.ne.s32.totalorder %s322, %s324
      %p331 = scmp.eq.s32.totalorder %s31, 3
      %p332 = por %p330, %p331
      %p333 = scmp.ne.s32.totalorder %s324, %s325
      %p334 = scmp.eq.s32.totalorder %s31, 0
      %p335 = por %p333, %p334
      %p336 = scmp.ne.s32.totalorder %s324, %s325
      %p337 = scmp.eq.s32.totalorder %s32, 3
      %p338 = por %p336, %p337
      %p340 = scmp.ne.s32.totalorder %s325, %s339
      %p341 = scmp.eq.s32.totalorder %s32, 0
      %p342 = por %p340, %p341
      %s344 = sadd.s32 %s343, 1
      %p347 = scmp.eq.s32.totalorder %s26, 3
      %p348 = scmp.ne.s32.totalorder %s343, %s345
      %p349 = scmp.eq.s32.totalorder %s26, 0
      %p350 = por %p348, %p349
      %p351 = scmp.ne.s32.totalorder %s343, %s345
      %p352 = scmp.eq.s32.totalorder %s31, 3
      %p353 = por %p351, %p352
      %p354 = scmp.ne.s32.totalorder %s345, %s346
      %p355 = scmp.eq.s32.totalorder %s31, 0
      %p356 = por %p354, %p355
      %p357 = scmp.ne.s32.totalorder %s345, %s346
      %p358 = scmp.eq.s32.totalorder %s32, 3
      %p359 = por %p357, %p358
      %p361 = scmp.ne.s32.totalorder %s346, %s360
      %p362 = scmp.eq.s32.totalorder %s32, 0
      %p363 = por %p361, %p362
      %s365 = sadd.s32 %s364, 1
      %p368 = scmp.eq.s32.totalorder %s26, 3
      %p369 = scmp.ne.s32.totalorder %s364, %s366
      %p370 = scmp.eq.s32.totalorder %s26, 0
      %p371 = por %p369, %p370
      %p372 = scmp.ne.s32.totalorder %s364, %s366
      %p373 = scmp.eq.s32.totalorder %s31, 3
      %p374 = por %p372, %p373
      %p375 = scmp.ne.s32.totalorder %s366, %s367
      %p376 = scmp.eq.s32.totalorder %s31, 0
      %p377 = por %p375, %p376
      %p378 = scmp.ne.s32.totalorder %s366, %s367
      %p379 = scmp.eq.s32.totalorder %s32, 3
      %p380 = por %p378, %p379
      %p382 = scmp.ne.s32.totalorder %s367, %s381
      %p383 = scmp.eq.s32.totalorder %s32, 0
      %p384 = por %p382, %p383
      %s386 = sadd.s32 %s385, 1
      %p389 = scmp.eq.s32.totalorder %s26, 3
      %p390 = scmp.ne.s32.totalorder %s385, %s387
      %p391 = scmp.eq.s32.totalorder %s26, 0
      %p392 = por %p390, %p391
      %p393 = scmp.ne.s32.totalorder %s385, %s387
      %p394 = scmp.eq.s32.totalorder %s31, 3
      %p395 = por %p393, %p394
      %p396 = scmp.ne.s32.totalorder %s387, %s388
      %p397 = scmp.eq.s32.totalorder %s31, 0
      %p398 = por %p396, %p397
      %p399 = scmp.ne.s32.totalorder %s387, %s388
      %p400 = scmp.eq.s32.totalorder %s32, 3
      %p401 = por %p399, %p400
      %p403 = scmp.ne.s32.totalorder %s388, %s402
      %p404 = scmp.eq.s32.totalorder %s32, 0
      %p405 = por %p403, %p404
      %s406 = ssub.s32 %s26, %s33
      %p407 = scmp.eq.s32.totalorder %s406, 0
      %s409 = sadd.s32 %s408, 1
      %s410 = scalar_select %p407, %s408, %s409
      %p413 = pneg %p407
      %p414 = scmp.eq.s32.totalorder %s26, 3
      %p415 = por %p413, %p414
      %p416 = scmp.ne.s32.totalorder %s408, %s411
      %p417 = scmp.eq.s32.totalorder %s26, 0
      %p418 = por %p416, %p417
      %p419 = scmp.ne.s32.totalorder %s408, %s411
      %p420 = scmp.eq.s32.totalorder %s31, 3
      %p421 = por %p419, %p420
      %p422 = scmp.ne.s32.totalorder %s411, %s412
      %p423 = scmp.eq.s32.totalorder %s31, 0
      %p424 = por %p422, %p423
      %p425 = scmp.ne.s32.totalorder %s411, %s412
      %p426 = scmp.eq.s32.totalorder %s32, 3
      %p427 = por %p425, %p426
      %p429 = scmp.ne.s32.totalorder %s412, %s428
      %p430 = scmp.eq.s32.totalorder %s32, 0
      %p431 = por %p429, %p430
      %p432 = scmp.le.s32.totalorder 1, %s26
      %p433 = scmp.lt.s32.totalorder %s26, 5
      %p434 = pnand %p432, %p433
      %p435 = pneg %p434
      // Predicated region
      $region9: #{point_encoding_forward.1} parent=5 // pred_check
        _
      $region10: #{point_encoding_forward.1} parent=5 // pred_check_branch
        %437 = sbr.rel (%p434) target = $region12
      $region11: #{point_encoding_forward.1} parent=5 // pred_region
        %s438 = ssub.s32 %s26, 1
        // Predicated region
        $region13: #{point_encoding_forward.1} parent=11 // pred_check
          %p439 = pneg %p125
        $region14: #{point_encoding_forward.1} parent=11 // pred_check_branch
          %441 = sbr.rel (%p439) target = $region16
        $region15: #{point_encoding_forward.1} parent=11 // pred_region
          _
        $region16: #{point_encoding_forward.1} parent=11 // pred_fallthru
          _
        // Predicated region
        $region17: #{point_encoding_forward.1} parent=11 // pred_check
          %p442 = pneg %p146
        $region18: #{point_encoding_forward.1} parent=11 // pred_check_branch
          %444 = sbr.rel (%p442) target = $region20
        $region19: #{point_encoding_forward.1} parent=11 // pred_region
          _
        $region20: #{point_encoding_forward.1} parent=11 // pred_fallthru
          _
        // Predicated region
        $region21: #{point_encoding_forward.1} parent=11 // pred_check
          %p445 = pneg %p167
        $region22: #{point_encoding_forward.1} parent=11 // pred_check_branch
          %447 = sbr.rel (%p445) target = $region24
        $region23: #{point_encoding_forward.1} parent=11 // pred_region
          _
        $region24: #{point_encoding_forward.1} parent=11 // pred_fallthru
          _
        // Predicated region
        $region25: #{point_encoding_forward.1} parent=11 // pred_check
          %p448 = pneg %p188
        $region26: #{point_encoding_forward.1} parent=11 // pred_check_branch
          %450 = sbr.rel (%p448) target = $region28
        $region27: #{point_encoding_forward.1} parent=11 // pred_region
          _
        $region28: #{point_encoding_forward.1} parent=11 // pred_fallthru
          _
        // Predicated region
        $region29: #{point_encoding_forward.1} parent=11 // pred_check
          %p451 = pneg %p209
        $region30: #{point_encoding_forward.1} parent=11 // pred_check_branch
          %453 = sbr.rel (%p451) target = $region32
        $region31: #{point_encoding_forward.1} parent=11 // pred_region
          _
        $region32: #{point_encoding_forward.1} parent=11 // pred_fallthru
          _
        // Predicated region
        $region33: #{point_encoding_forward.1} parent=11 // pred_check
          %p454 = pneg %p230
        $region34: #{point_encoding_forward.1} parent=11 // pred_check_branch
          %456 = sbr.rel (%p454) target = $region36
        $region35: #{point_encoding_forward.1} parent=11 // pred_region
          _
        $region36: #{point_encoding_forward.1} parent=11 // pred_fallthru
          _
        // Predicated region
        $region37: #{point_encoding_forward.1} parent=11 // pred_check
          %p457 = pneg %p251
        $region38: #{point_encoding_forward.1} parent=11 // pred_check_branch
          %459 = sbr.rel (%p457) target = $region40
        $region39: #{point_encoding_forward.1} parent=11 // pred_region
          _
        $region40: #{point_encoding_forward.1} parent=11 // pred_fallthru
          _
        // Predicated region
        $region41: #{point_encoding_forward.1} parent=11 // pred_check
          %p460 = pneg %p272
        $region42: #{point_encoding_forward.1} parent=11 // pred_check_branch
          %462 = sbr.rel (%p460) target = $region44
        $region43: #{point_encoding_forward.1} parent=11 // pred_region
          _
        $region44: #{point_encoding_forward.1} parent=11 // pred_fallthru
          _
        // Predicated region
        $region45: #{point_encoding_forward.1} parent=11 // pred_check
          %p463 = pneg %p293
        $region46: #{point_encoding_forward.1} parent=11 // pred_check_branch
          %465 = sbr.rel (%p463) target = $region48
        $region47: #{point_encoding_forward.1} parent=11 // pred_region
          _
        $region48: #{point_encoding_forward.1} parent=11 // pred_fallthru
          _
        // Predicated region
        $region49: #{point_encoding_forward.1} parent=11 // pred_check
          %p466 = pneg %p314
        $region50: #{point_encoding_forward.1} parent=11 // pred_check_branch
          %468 = sbr.rel (%p466) target = $region52
        $region51: #{point_encoding_forward.1} parent=11 // pred_region
          _
        $region52: #{point_encoding_forward.1} parent=11 // pred_fallthru
          _
        // Predicated region
        $region53: #{point_encoding_forward.1} parent=11 // pred_check
          %p469 = pneg %p335
        $region54: #{point_encoding_forward.1} parent=11 // pred_check_branch
          %471 = sbr.rel (%p469) target = $region56
        $region55: #{point_encoding_forward.1} parent=11 // pred_region
          _
        $region56: #{point_encoding_forward.1} parent=11 // pred_fallthru
          _
        // Predicated region
        $region57: #{point_encoding_forward.1} parent=11 // pred_check
          %p472 = pneg %p356
        $region58: #{point_encoding_forward.1} parent=11 // pred_check_branch
          %474 = sbr.rel (%p472) target = $region60
        $region59: #{point_encoding_forward.1} parent=11 // pred_region
          _
        $region60: #{point_encoding_forward.1} parent=11 // pred_fallthru
          _
        // Predicated region
        $region61: #{point_encoding_forward.1} parent=11 // pred_check
          %p475 = pneg %p377
        $region62: #{point_encoding_forward.1} parent=11 // pred_check_branch
          %477 = sbr.rel (%p475) target = $region64
        $region63: #{point_encoding_forward.1} parent=11 // pred_region
          _
        $region64: #{point_encoding_forward.1} parent=11 // pred_fallthru
          _
        // Predicated region
        $region65: #{point_encoding_forward.1} parent=11 // pred_check
          %p478 = pneg %p398
        $region66: #{point_encoding_forward.1} parent=11 // pred_check_branch
          %480 = sbr.rel (%p478) target = $region68
        $region67: #{point_encoding_forward.1} parent=11 // pred_region
          _
        $region68: #{point_encoding_forward.1} parent=11 // pred_fallthru
          _
      $region12: #{point_encoding_forward.1} parent=5 // pred_fallthru
        _
      %p481 = scmp.lt.s32.totalorder %s26, 4
      // Predicated region
      $region69: #{point_encoding_forward.1} parent=5 // pred_check
        %p482 = pneg %p481
      $region70: #{point_encoding_forward.1} parent=5 // pred_check_branch
        %484 = sbr.rel (%p482) target = $region72
      $region71: #{point_encoding_forward.1} parent=5 // pred_region
        // Predicated region
        $region73: #{point_encoding_forward.1} parent=71 // pred_check
          %p485 = pneg %p46
        $region74: #{point_encoding_forward.1} parent=71 // pred_check_branch
          %487 = sbr.rel (%p485) target = $region76
        $region75: #{point_encoding_forward.1} parent=71 // pred_region
          %s488 = smul.u32 8, %s26
          %p489 = scmp.lt.s32.totalorder %s488, 31
          %s490 = scalar_select %p489, %s488, 31
          %s491 = smul.addr %s490, 4
          %s492 = scalar_lea.vmem %s0, %s491
          %s493 = smul.u32 8, %s26
        $region76: #{point_encoding_forward.1} parent=71 // pred_fallthru
          _
        // Predicated region
        $region77: #{point_encoding_forward.1} parent=71 // pred_check
          %p494 = pneg %p72
        $region78: #{point_encoding_forward.1} parent=71 // pred_check_branch
          %496 = sbr.rel (%p494) target = $region80
        $region79: #{point_encoding_forward.1} parent=71 // pred_region
          %p497 = scmp.lt.s32.totalorder %s26, 3
          %s498 = scalar_select %p497, %s26, 3
          %s499 = smul.addr %s498, 8
          %s500 = scalar_lea.vmem %s1, %s499
        $region80: #{point_encoding_forward.1} parent=71 // pred_fallthru
          _
        // Predicated region
        $region81: #{point_encoding_forward.1} parent=71 // pred_check
          %p501 = pneg %p98
        $region82: #{point_encoding_forward.1} parent=71 // pred_check_branch
          %503 = sbr.rel (%p501) target = $region84
        $region83: #{point_encoding_forward.1} parent=71 // pred_region
          %p504 = scmp.lt.s32.totalorder %s26, 3
          %s505 = scalar_select %p504, %s26, 3
          %s506 = smul.addr %s505, 8
          %s507 = scalar_lea.vmem %s2, %s506
        $region84: #{point_encoding_forward.1} parent=71 // pred_fallthru
          _
      $region72: #{point_encoding_forward.1} parent=5 // pred_fallthru
        _
      %p508 = scmp.le.s32.totalorder 1, %s26
      %p509 = scmp.lt.s32.totalorder %s26, 5
      %p510 = pnand %p508, %p509
      %p511 = pneg %p510
      // Predicated region
      $region85: #{point_encoding_forward.1} parent=5 // pred_check
        _
      $region86: #{point_encoding_forward.1} parent=5 // pred_check_branch
        %513 = sbr.rel (%p510) target = $region88
      $region87: #{point_encoding_forward.1} parent=5 // pred_region
        %s514 = ssub.s32 %s26, 1
        %s515 = smul.u32 8, %s31
        %p516 = scmp.lt.s32.totalorder %s515, 31
        %s517 = scalar_select %p516, %s515, 31
        %s518 = smul.addr %s517, 4
        %s519 = scalar_lea.vmem %s0, %s518
        %p520 = pneg %p52
        %p521 = pneg %p49
        %p522 = scmp.lt.s32.totalorder %s31, 3
        %s523 = scalar_select %p522, %s31, 3
        %s524 = smul.addr %s523, 8
        %s525 = scalar_lea.vmem %s1, %s524
        %p526 = pneg %p78
        %p527 = pneg %p75
        %p528 = scmp.lt.s32.totalorder %s31, 3
        %s529 = scalar_select %p528, %s31, 3
        %s530 = smul.addr %s529, 8
        %s531 = scalar_lea.vmem %s2, %s530
        %p532 = pneg %p104
        %p533 = pneg %p101
        %p534 = pneg %p125
        %p535 = pneg %p122
        %p536 = pneg %p146
        %p537 = pneg %p143
        %p538 = pneg %p167
        %p539 = pneg %p164
        %p540 = pneg %p188
        %p541 = pneg %p185
        %p542 = pneg %p209
        %p543 = pneg %p206
        %p544 = pneg %p230
        %p545 = pneg %p227
        %p546 = pneg %p251
        %p547 = pneg %p248
        %p548 = pneg %p272
        %p549 = pneg %p269
        %p550 = pneg %p293
        %p551 = pneg %p290
        %p552 = pneg %p314
        %p553 = pneg %p311
        %p554 = pneg %p335
        %p555 = pneg %p332
        %p556 = pneg %p356
        %p557 = pneg %p353
        %p558 = pneg %p377
        %p559 = pneg %p374
        %p560 = pneg %p398
        %p561 = pneg %p395
        %p562 = pneg %p424
        %p563 = pneg %p421
        %s564 = sand.u32 %s411, 1
        %s565 = scalar_lea.sflag [#allocation3], %s564
        %s566 = sand.u32 %s411, 1
        %s567 = smul.addr %s566, 8
        %s568 = scalar_lea.vmem [#allocation2], %s567
        %s569 = smul.u32 8, %s31
        %p570 = scmp.lt.s32.totalorder %s569, 31
        %s571 = scalar_select %p570, %s569, 31
        %s572 = smul.addr %s571, 4
        %s573 = scalar_lea.vmem %s0, %s572
        %s574 = smul.u32 8, %s31
        %p575 = scmp.lt.s32.totalorder %s31, 3
        %s576 = scalar_select %p575, %s31, 3
        %s577 = smul.addr %s576, 8
        %s578 = scalar_lea.vmem %s1, %s577
        %p579 = scmp.lt.s32.totalorder %s31, 3
        %s580 = scalar_select %p579, %s31, 3
        %s581 = smul.addr %s580, 8
        %s582 = scalar_lea.vmem %s2, %s581
        %v584 = vld [vmem:[%s573] sm:$0xf]
        %v585 = vld [vmem:[%s573 + $0x4] sm:$0xf]
        %v586 = vld [vmem:[%s573 + $0x8] sm:$0xf]
        %v587 = vld [vmem:[%s573 + $0xc] sm:$0xf]
        %v588 = vld [vmem:[%s573 + $0x10] sm:$0xf]
        %v589 = vld [vmem:[%s573 + $0x14] sm:$0xf]
        %v590 = vld [vmem:[%s573 + $0x18] sm:$0xf]
        %v591 = vld [vmem:[%s573 + $0x1c] sm:$0xf]
        %v592 = vld [vmem:[%s3] sm:$0xf]
        %v593 = vld [vmem:[%s3 + $0x4] sm:$0xf]
        %v594 = vld [vmem:[%s3 + $0x8] sm:$0xf]
        %v595 = vld [vmem:[%s3 + $0xc] sm:$0xf]
        %v596 = vld [vmem:[%s3 + $0x10] sm:$0xf]
        %v597 = vld [vmem:[%s3 + $0x14] sm:$0xf]
        %v598 = vld [vmem:[%s3 + $0x18] sm:$0xf]
        %v599 = vld [vmem:[%s3 + $0x1c] sm:$0xf]
        %v600 = vld [vmem:[%s3 + $0x20] sm:$0xf]
        %v601 = vld [vmem:[%s3 + $0x24] sm:$0xf]
        %v602 = vld [vmem:[%s3 + $0x28] sm:$0xf]
        %v603 = vld [vmem:[%s3 + $0x2c] sm:$0xf]
        %v604 = vld [vmem:[%s3 + $0x30] sm:$0xf]
        %v605 = vld [vmem:[%s3 + $0x34] sm:$0xf]
        %v606 = vld [vmem:[%s3 + $0x38] sm:$0xf]
        %v607 = vld [vmem:[%s3 + $0x3c] sm:$0xf]
        %v608 = vld [vmem:[%s4] sm:$0x1]
        %v610 = vlaneseq
        %v611 = vshrl.u32 %v610, 7
        %v612 = vsub.s32 0, %v611
        %v613 = vrot.slane %v608, %v612
        %v623 = vunpack.c.l.b16 %v584
        %v624 = vunpack.c.l.b16 %v585
        %v625 = vunpack.c.l.b16 %v586
        %v626 = vunpack.c.l.b16 %v587
        %v627 = vunpack.c.l.b16 %v588
        %v628 = vunpack.c.l.b16 %v589
        %v629 = vunpack.c.l.b16 %v590
        %v630 = vunpack.c.l.b16 %v591
        %v631 = vpack.c.b16 %v624, %v623
        %v632 = vpack.c.b16 %v626, %v625
        %v633 = vpack.c.b16 %v628, %v627
        %v634 = vpack.c.b16 %v630, %v629
        %v655 = vunpack.c.l.b16 %v592
        %v656 = vunpack.c.l.b16 %v593
        %v657 = vunpack.c.l.b16 %v594
        %v658 = vunpack.c.l.b16 %v595
        %v659 = vunpack.c.l.b16 %v596
        %v660 = vunpack.c.l.b16 %v597
        %v661 = vunpack.c.l.b16 %v598
        %v662 = vunpack.c.l.b16 %v599
        %v663 = vunpack.c.l.b16 %v600
        %v664 = vunpack.c.l.b16 %v601
        %v665 = vunpack.c.l.b16 %v602
        %v666 = vunpack.c.l.b16 %v603
        %v667 = vunpack.c.l.b16 %v604
        %v668 = vunpack.c.l.b16 %v605
        %v669 = vunpack.c.l.b16 %v606
        %v670 = vunpack.c.l.b16 %v607
        %v671 = vpack.c.b16 %v656, %v655
        %v672 = vpack.c.b16 %v658, %v657
        %v673 = vpack.c.b16 %v660, %v659
        %v674 = vpack.c.b16 %v662, %v661
        %v675 = vpack.c.b16 %v664, %v663
        %v676 = vpack.c.b16 %v666, %v665
        %v677 = vpack.c.b16 %v668, %v667
        %v678 = vpack.c.b16 %v670, %v669
        %687 = vmatprep.subr.bf16.mxu0 0
        %688 = vmatpush1.bf16.msra.mxu0 %v678
        %689 = vmatprep.subr.bf16.mxu0 0
        %690 = vmatpush1.bf16.msra.mxu0 %v677
        %691 = vmatprep.subr.bf16.mxu0 0
        %692 = vmatpush1.bf16.msra.mxu0 %v676
        %693 = vmatprep.subr.bf16.mxu0 0
        %694 = vmatpush1.bf16.msra.mxu0 %v675
        %695 = vmatprep.subr.bf16.mxu0 0
        %696 = vmatpush1.bf16.msra.mxu0 %v674
        %697 = vmatprep.subr.bf16.mxu0 0
        %698 = vmatpush1.bf16.msra.mxu0 %v673
        %699 = vmatprep.subr.bf16.mxu0 0
        %700 = vmatpush1.bf16.msra.mxu0 %v672
        %701 = vmatprep.subr.bf16.mxu0 0
        %702 = vmatpush1.bf16.msra.mxu0 %v671
        %703 = vmatprep.subr.bf16.mxu0 0
        %704 = vmatpush2.bf16.msra.mxu0 0
        %705 = vmatprep.subr.bf16.mxu0 0
        %706 = vmatpush2.bf16.msra.mxu0 0
        %707 = vmatprep.subr.bf16.mxu0 0
        %708 = vmatpush2.bf16.msra.mxu0 0
        %709 = vmatprep.subr.bf16.mxu0 0
        %710 = vmatpush2.bf16.msra.mxu0 0
        %711 = vmatprep.subr.bf16.mxu0 0
        %712 = vmatpush2.bf16.msra.mxu0 0
        %713 = vmatprep.subr.bf16.mxu0 0
        %714 = vmatpush2.bf16.msra.mxu0 0
        %715 = vmatprep.subr.bf16.mxu0 0
        %716 = vmatpush2.bf16.msra.mxu0 0
        %717 = vmatprep.subr.bf16.mxu0 0
        %718 = vmatpush2.bf16.msra.mxu0 0
        %719 = vmatprep.mubr.bf16.mxu0 0
        %720 = vmatmul.mubr.bf16.gmra.mxu0 %v631
        %v721 = vpop.f32.mrf.mxu0
        %v722 = vadd.f32 %v613, %v721
        %v723 = vpop.f32.mrf.mxu0
        %v724 = vpop.f32.mrf.mxu0
        %v725 = vadd.f32 %v613, %v724
        %v726 = vpop.f32.mrf.mxu0
        %727 = vmatprep.mubr.bf16.mxu0 0
        %728 = vmatmul.mubr.bf16.gmra.mxu0 %v632
        %v729 = vpop.f32.mrf.mxu0
        %v730 = vadd.f32 %v613, %v729
        %v731 = vpop.f32.mrf.mxu0
        %v732 = vpop.f32.mrf.mxu0
        %v733 = vadd.f32 %v613, %v732
        %v734 = vpop.f32.mrf.mxu0
        %735 = vmatprep.mubr.bf16.mxu0 0
        %736 = vmatmul.mubr.bf16.gmra.mxu0 %v633
        %v737 = vpop.f32.mrf.mxu0
        %v738 = vadd.f32 %v613, %v737
        %v739 = vpop.f32.mrf.mxu0
        %v740 = vpop.f32.mrf.mxu0
        %v741 = vadd.f32 %v613, %v740
        %v742 = vpop.f32.mrf.mxu0
        %743 = vmatprep.mubr.bf16.mxu0 0
        %744 = vmatmul.mubr.bf16.gmra.mxu0 %v634
        %v745 = vpop.f32.mrf.mxu0
        %v746 = vadd.f32 %v613, %v745
        %v747 = vpop.f32.mrf.mxu0
        %v748 = vpop.f32.mrf.mxu0
        %v749 = vadd.f32 %v613, %v748
        %v750 = vpop.f32.mrf.mxu0
        %751 = vdwg.mxu0
        %v752 = vmax.f32 %v722, 0.0
        %v753 = vmax.f32 %v725, 0.0
        %v754 = vmax.f32 %v730, 0.0
        %v755 = vmax.f32 %v733, 0.0
        %v756 = vmax.f32 %v738, 0.0
        %v757 = vmax.f32 %v741, 0.0
        %v758 = vmax.f32 %v746, 0.0
        %v759 = vmax.f32 %v749, 0.0
        %v760 = vpack.c.bf16 %v753, %v752
        %v761 = vpack.c.bf16 %v755, %v754
        %v762 = vpack.c.bf16 %v757, %v756
        %v763 = vpack.c.bf16 %v759, %v758
        %v764 = vld [vmem:[%s5] sm:$0xf]
        %v765 = vld [vmem:[%s5 + $0x4] sm:$0xf]
        %v766 = vld [vmem:[%s5 + $0x8] sm:$0xf]
        %v767 = vld [vmem:[%s5 + $0xc] sm:$0xf]
        %v768 = vld [vmem:[%s5 + $0x10] sm:$0xf]
        %v769 = vld [vmem:[%s5 + $0x14] sm:$0xf]
        %v770 = vld [vmem:[%s5 + $0x18] sm:$0xf]
        %v771 = vld [vmem:[%s5 + $0x1c] sm:$0xf]
        %v772 = vld [vmem:[%s6] sm:$0x1]
        %v774 = vlaneseq
        %v775 = vshrl.u32 %v774, 7
        %v776 = vsub.s32 0, %v775
        %v777 = vrot.slane %v772, %v776
        %v787 = vunpack.c.l.b16 %v764
        %v788 = vunpack.c.l.b16 %v765
        %v789 = vunpack.c.l.b16 %v766
        %v790 = vunpack.c.l.b16 %v767
        %v791 = vunpack.c.l.b16 %v768
        %v792 = vunpack.c.l.b16 %v769
        %v793 = vunpack.c.l.b16 %v770
        %v794 = vunpack.c.l.b16 %v771
        %v795 = vpack.c.b16 %v788, %v787
        %v796 = vpack.c.b16 %v790, %v789
        %v797 = vpack.c.b16 %v792, %v791
        %v798 = vpack.c.b16 %v794, %v793
        %vm803 = vcmask 523264
        %v805 = vsel %vm803, %v760, 0
        %v808 = vsel %vm803, %v761, 0
        %v811 = vsel %vm803, %v762, 0
        %v814 = vsel %vm803, %v763, 0
        %816 = vmatprep.subr.bf16.mxu0 0
        %817 = vmatpush1.bf16.msra.mxu0 0
        %818 = vmatprep.subr.bf16.mxu0 0
        %819 = vmatpush1.bf16.msra.mxu0 0
        %820 = vmatprep.subr.bf16.mxu0 0
        %821 = vmatpush1.bf16.msra.mxu0 0
        %822 = vmatprep.subr.bf16.mxu0 0
        %823 = vmatpush1.bf16.msra.mxu0 0
        %824 = vmatprep.subr.bf16.mxu0 0
        %825 = vmatpush1.bf16.msra.mxu0 %v798
        %826 = vmatprep.subr.bf16.mxu0 0
        %827 = vmatpush1.bf16.msra.mxu0 %v797
        %828 = vmatprep.subr.bf16.mxu0 0
        %829 = vmatpush1.bf16.msra.mxu0 %v796
        %830 = vmatprep.subr.bf16.mxu0 0
        %831 = vmatpush1.bf16.msra.mxu0 %v795
        %832 = vmatprep.subr.bf16.mxu0 0
        %833 = vmatpush2.bf16.msra.mxu0 0
        %834 = vmatprep.subr.bf16.mxu0 0
        %835 = vmatpush2.bf16.msra.mxu0 0
        %836 = vmatprep.subr.bf16.mxu0 0
        %837 = vmatpush2.bf16.msra.mxu0 0
        %838 = vmatprep.subr.bf16.mxu0 0
        %839 = vmatpush2.bf16.msra.mxu0 0
        %840 = vmatprep.subr.bf16.mxu0 0
        %841 = vmatpush2.bf16.msra.mxu0 0
        %842 = vmatprep.subr.bf16.mxu0 0
        %843 = vmatpush2.bf16.msra.mxu0 0
        %844 = vmatprep.subr.bf16.mxu0 0
        %845 = vmatpush2.bf16.msra.mxu0 0
        %846 = vmatprep.subr.bf16.mxu0 0
        %847 = vmatpush2.bf16.msra.mxu0 0
        %848 = vmatprep.mubr.bf16.mxu0 0
        %849 = vmatmul.mubr.bf16.gmra.mxu0 %v805
        %v850 = vpop.f32.mrf.mxu0
        %v851 = vadd.f32 %v777, %v850
        %v852 = vpop.f32.mrf.mxu0
        %v853 = vpop.f32.mrf.mxu0
        %v854 = vadd.f32 %v777, %v853
        %v855 = vpop.f32.mrf.mxu0
        %856 = vmatprep.mubr.bf16.mxu0 0
        %857 = vmatmul.mubr.bf16.gmra.mxu0 %v808
        %v858 = vpop.f32.mrf.mxu0
        %v859 = vadd.f32 %v777, %v858
        %v860 = vpop.f32.mrf.mxu0
        %v861 = vpop.f32.mrf.mxu0
        %v862 = vadd.f32 %v777, %v861
        %v863 = vpop.f32.mrf.mxu0
        %864 = vmatprep.mubr.bf16.mxu0 0
        %865 = vmatmul.mubr.bf16.gmra.mxu0 %v811
        %v866 = vpop.f32.mrf.mxu0
        %v867 = vadd.f32 %v777, %v866
        %v868 = vpop.f32.mrf.mxu0
        %v869 = vpop.f32.mrf.mxu0
        %v870 = vadd.f32 %v777, %v869
        %v871 = vpop.f32.mrf.mxu0
        %872 = vmatprep.mubr.bf16.mxu0 0
        %873 = vmatmul.mubr.bf16.gmra.mxu0 %v814
        %v874 = vpop.f32.mrf.mxu0
        %v875 = vadd.f32 %v777, %v874
        %v876 = vpop.f32.mrf.mxu0
        %v877 = vpop.f32.mrf.mxu0
        %v878 = vadd.f32 %v777, %v877
        %v879 = vpop.f32.mrf.mxu0
        %880 = vdwg.mxu0
        %v881 = vmax.f32 %v851, 0.0
        %v882 = vmax.f32 %v854, 0.0
        %v883 = vmax.f32 %v859, 0.0
        %v884 = vmax.f32 %v862, 0.0
        %v885 = vmax.f32 %v867, 0.0
        %v886 = vmax.f32 %v870, 0.0
        %v887 = vmax.f32 %v875, 0.0
        %v888 = vmax.f32 %v878, 0.0
        %v889 = vpack.c.bf16 %v882, %v881
        %v890 = vpack.c.bf16 %v884, %v883
        %v891 = vpack.c.bf16 %v886, %v885
        %v892 = vpack.c.bf16 %v888, %v887
        %v893 = vld [vmem:[%s7] sm:$0xf]
        %v894 = vld [vmem:[%s7 + $0x4] sm:$0xf]
        %v895 = vld [vmem:[%s7 + $0x8] sm:$0xf]
        %v896 = vld [vmem:[%s7 + $0xc] sm:$0xf]
        %v897 = vld [vmem:[%s7 + $0x10] sm:$0xf]
        %v898 = vld [vmem:[%s7 + $0x14] sm:$0xf]
        %v899 = vld [vmem:[%s7 + $0x18] sm:$0xf]
        %v900 = vld [vmem:[%s7 + $0x1c] sm:$0xf]
        %v901 = vld [vmem:[%s8] sm:$0x1]
        %v903 = vlaneseq
        %v904 = vshrl.u32 %v903, 7
        %v905 = vsub.s32 0, %v904
        %v906 = vrot.slane %v901, %v905
        %v916 = vunpack.c.l.b16 %v893
        %v917 = vunpack.c.l.b16 %v894
        %v918 = vunpack.c.l.b16 %v895
        %v919 = vunpack.c.l.b16 %v896
        %v920 = vunpack.c.l.b16 %v897
        %v921 = vunpack.c.l.b16 %v898
        %v922 = vunpack.c.l.b16 %v899
        %v923 = vunpack.c.l.b16 %v900
        %v924 = vpack.c.b16 %v917, %v916
        %v925 = vpack.c.b16 %v919, %v918
        %v926 = vpack.c.b16 %v921, %v920
        %v927 = vpack.c.b16 %v923, %v922
        %v933 = vsel %vm803, %v889, 0
        %v936 = vsel %vm803, %v890, 0
        %v939 = vsel %vm803, %v891, 0
        %v942 = vsel %vm803, %v892, 0
        %944 = vmatprep.subr.bf16.mxu0 0
        %945 = vmatpush1.bf16.msra.mxu0 0
        %946 = vmatprep.subr.bf16.mxu0 0
        %947 = vmatpush1.bf16.msra.mxu0 0
        %948 = vmatprep.subr.bf16.mxu0 0
        %949 = vmatpush1.bf16.msra.mxu0 0
        %950 = vmatprep.subr.bf16.mxu0 0
        %951 = vmatpush1.bf16.msra.mxu0 0
        %952 = vmatprep.subr.bf16.mxu0 0
        %953 = vmatpush1.bf16.msra.mxu0 %v927
        %954 = vmatprep.subr.bf16.mxu0 0
        %955 = vmatpush1.bf16.msra.mxu0 %v926
        %956 = vmatprep.subr.bf16.mxu0 0
        %957 = vmatpush1.bf16.msra.mxu0 %v925
        %958 = vmatprep.subr.bf16.mxu0 0
        %959 = vmatpush1.bf16.msra.mxu0 %v924
        %960 = vmatprep.subr.bf16.mxu0 0
        %961 = vmatpush2.bf16.msra.mxu0 0
        %962 = vmatprep.subr.bf16.mxu0 0
        %963 = vmatpush2.bf16.msra.mxu0 0
        %964 = vmatprep.subr.bf16.mxu0 0
        %965 = vmatpush2.bf16.msra.mxu0 0
        %966 = vmatprep.subr.bf16.mxu0 0
        %967 = vmatpush2.bf16.msra.mxu0 0
        %968 = vmatprep.subr.bf16.mxu0 0
        %969 = vmatpush2.bf16.msra.mxu0 0
        %970 = vmatprep.subr.bf16.mxu0 0
        %971 = vmatpush2.bf16.msra.mxu0 0
        %972 = vmatprep.subr.bf16.mxu0 0
        %973 = vmatpush2.bf16.msra.mxu0 0
        %974 = vmatprep.subr.bf16.mxu0 0
        %975 = vmatpush2.bf16.msra.mxu0 0
        %976 = vmatprep.mubr.bf16.mxu0 0
        %977 = vmatmul.mubr.bf16.gmra.mxu0 %v933
        %v978 = vpop.f32.mrf.mxu0
        %v979 = vadd.f32 %v906, %v978
        %v980 = vpop.f32.mrf.mxu0
        %v981 = vpop.f32.mrf.mxu0
        %v982 = vadd.f32 %v906, %v981
        %v983 = vpop.f32.mrf.mxu0
        %984 = vmatprep.mubr.bf16.mxu0 0
        %985 = vmatmul.mubr.bf16.gmra.mxu0 %v936
        %v986 = vpop.f32.mrf.mxu0
        %v987 = vadd.f32 %v906, %v986
        %v988 = vpop.f32.mrf.mxu0
        %v989 = vpop.f32.mrf.mxu0
        %v990 = vadd.f32 %v906, %v989
        %v991 = vpop.f32.mrf.mxu0
        %992 = vmatprep.mubr.bf16.mxu0 0
        %993 = vmatmul.mubr.bf16.gmra.mxu0 %v939
        %v994 = vpop.f32.mrf.mxu0
        %v995 = vadd.f32 %v906, %v994
        %v996 = vpop.f32.mrf.mxu0
        %v997 = vpop.f32.mrf.mxu0
        %v998 = vadd.f32 %v906, %v997
        %v999 = vpop.f32.mrf.mxu0
        %1000 = vmatprep.mubr.bf16.mxu0 0
        %1001 = vmatmul.mubr.bf16.gmra.mxu0 %v942
        %v1002 = vpop.f32.mrf.mxu0
        %v1003 = vadd.f32 %v906, %v1002
        %v1004 = vpop.f32.mrf.mxu0
        %v1005 = vpop.f32.mrf.mxu0
        %v1006 = vadd.f32 %v906, %v1005
        %v1007 = vpop.f32.mrf.mxu0
        %1008 = vdwg.mxu0
        %vm1009 = vcmask 261120
        %v1010 = vsel %vm1009, %v979, 0.0
        %v1011 = vrot.slane %v1010, 4
        %v1012 = vadd.f32 %v1010, %v1011
        %v1013 = vrot.slane %v1012, 2
        %v1014 = vadd.f32 %v1012, %v1013
        %v1015 = vrot.slane %v1014, 1
        %v1016 = vadd.f32 %v1014, %v1015
        %v1017 = vsel %vm1009, %v982, 0.0
        %v1018 = vrot.slane %v1017, 4
        %v1019 = vadd.f32 %v1017, %v1018
        %v1020 = vrot.slane %v1019, 2
        %v1021 = vadd.f32 %v1019, %v1020
        %v1022 = vrot.slane %v1021, 1
        %v1023 = vadd.f32 %v1021, %v1022
        %v1024 = vsel %vm1009, %v987, 0.0
        %v1025 = vrot.slane %v1024, 4
        %v1026 = vadd.f32 %v1024, %v1025
        %v1027 = vrot.slane %v1026, 2
        %v1028 = vadd.f32 %v1026, %v1027
        %v1029 = vrot.slane %v1028, 1
        %v1030 = vadd.f32 %v1028, %v1029
        %v1031 = vsel %vm1009, %v990, 0.0
        %v1032 = vrot.slane %v1031, 4
        %v1033 = vadd.f32 %v1031, %v1032
        %v1034 = vrot.slane %v1033, 2
        %v1035 = vadd.f32 %v1033, %v1034
        %v1036 = vrot.slane %v1035, 1
        %v1037 = vadd.f32 %v1035, %v1036
        %v1038 = vsel %vm1009, %v995, 0.0
        %v1039 = vrot.slane %v1038, 4
        %v1040 = vadd.f32 %v1038, %v1039
        %v1041 = vrot.slane %v1040, 2
        %v1042 = vadd.f32 %v1040, %v1041
        %v1043 = vrot.slane %v1042, 1
        %v1044 = vadd.f32 %v1042, %v1043
        %v1045 = vsel %vm1009, %v998, 0.0
        %v1046 = vrot.slane %v1045, 4
        %v1047 = vadd.f32 %v1045, %v1046
        %v1048 = vrot.slane %v1047, 2
        %v1049 = vadd.f32 %v1047, %v1048
        %v1050 = vrot.slane %v1049, 1
        %v1051 = vadd.f32 %v1049, %v1050
        %v1052 = vsel %vm1009, %v1003, 0.0
        %v1053 = vrot.slane %v1052, 4
        %v1054 = vadd.f32 %v1052, %v1053
        %v1055 = vrot.slane %v1054, 2
        %v1056 = vadd.f32 %v1054, %v1055
        %v1057 = vrot.slane %v1056, 1
        %v1058 = vadd.f32 %v1056, %v1057
        %v1059 = vsel %vm1009, %v1006, 0.0
        %v1060 = vrot.slane %v1059, 4
        %v1061 = vadd.f32 %v1059, %v1060
        %v1062 = vrot.slane %v1061, 2
        %v1063 = vadd.f32 %v1061, %v1062
        %v1064 = vrot.slane %v1063, 1
        %v1065 = vadd.f32 %v1063, %v1064
        %v1066 = vrcp.pop 8.0
        %v1067 = vmul.f32 %v1016, %v1066
        %v1068 = vmul.f32 %v1023, %v1066
        %v1069 = vmul.f32 %v1030, %v1066
        %v1070 = vmul.f32 %v1037, %v1066
        %v1071 = vmul.f32 %v1044, %v1066
        %v1072 = vmul.f32 %v1051, %v1066
        %v1073 = vmul.f32 %v1058, %v1066
        %v1074 = vmul.f32 %v1065, %v1066
        %v1075 = vsel %vm1009, %v979, -inf
        %v1076 = vrot.slane %v1075, 4
        %v1077 = vmax.f32 %v1075, %v1076
        %v1078 = vrot.slane %v1077, 2
        %v1079 = vmax.f32 %v1077, %v1078
        %v1080 = vrot.slane %v1079, 1
        %v1081 = vmax.f32 %v1079, %v1080
        %v1082 = vsel %vm1009, %v982, -inf
        %v1083 = vrot.slane %v1082, 4
        %v1084 = vmax.f32 %v1082, %v1083
        %v1085 = vrot.slane %v1084, 2
        %v1086 = vmax.f32 %v1084, %v1085
        %v1087 = vrot.slane %v1086, 1
        %v1088 = vmax.f32 %v1086, %v1087
        %v1089 = vsel %vm1009, %v987, -inf
        %v1090 = vrot.slane %v1089, 4
        %v1091 = vmax.f32 %v1089, %v1090
        %v1092 = vrot.slane %v1091, 2
        %v1093 = vmax.f32 %v1091, %v1092
        %v1094 = vrot.slane %v1093, 1
        %v1095 = vmax.f32 %v1093, %v1094
        %v1096 = vsel %vm1009, %v990, -inf
        %v1097 = vrot.slane %v1096, 4
        %v1098 = vmax.f32 %v1096, %v1097
        %v1099 = vrot.slane %v1098, 2
        %v1100 = vmax.f32 %v1098, %v1099
        %v1101 = vrot.slane %v1100, 1
        %v1102 = vmax.f32 %v1100, %v1101
        %v1103 = vsel %vm1009, %v995, -inf
        %v1104 = vrot.slane %v1103, 4
        %v1105 = vmax.f32 %v1103, %v1104
        %v1106 = vrot.slane %v1105, 2
        %v1107 = vmax.f32 %v1105, %v1106
        %v1108 = vrot.slane %v1107, 1
        %v1109 = vmax.f32 %v1107, %v1108
        %v1110 = vsel %vm1009, %v998, -inf
        %v1111 = vrot.slane %v1110, 4
        %v1112 = vmax.f32 %v1110, %v1111
        %v1113 = vrot.slane %v1112, 2
        %v1114 = vmax.f32 %v1112, %v1113
        %v1115 = vrot.slane %v1114, 1
        %v1116 = vmax.f32 %v1114, %v1115
        %v1117 = vsel %vm1009, %v1003, -inf
        %v1118 = vrot.slane %v1117, 4
        %v1119 = vmax.f32 %v1117, %v1118
        %v1120 = vrot.slane %v1119, 2
        %v1121 = vmax.f32 %v1119, %v1120
        %v1122 = vrot.slane %v1121, 1
        %v1123 = vmax.f32 %v1121, %v1122
        %v1124 = vsel %vm1009, %v1006, -inf
        %v1125 = vrot.slane %v1124, 4
        %v1126 = vmax.f32 %v1124, %v1125
        %v1127 = vrot.slane %v1126, 2
        %v1128 = vmax.f32 %v1126, %v1127
        %v1129 = vrot.slane %v1128, 1
        %v1130 = vmax.f32 %v1128, %v1129
        %v1131 = vpack.c.bf16 %v1067, %v1067
        %v1132 = vpack.c.bf16 %v1068, %v1068
        %v1133 = vpack.c.bf16 %v1069, %v1069
        %v1134 = vpack.c.bf16 %v1070, %v1070
        %v1135 = vpack.c.bf16 %v1071, %v1071
        %v1136 = vpack.c.bf16 %v1072, %v1072
        %v1137 = vpack.c.bf16 %v1073, %v1073
        %v1138 = vpack.c.bf16 %v1074, %v1074
        %v1139 = vld [vmem:[%s9] sm:$0xf]
        %v1140 = vld [vmem:[%s9 + $0x4] sm:$0xf]
        %v1141 = vld [vmem:[%s9 + $0x8] sm:$0xf]
        %v1142 = vld [vmem:[%s9 + $0xc] sm:$0xf]
        %v1143 = vpack.c.bf16 %v1081, %v1081
        %v1144 = vpack.c.bf16 %v1088, %v1088
        %v1145 = vpack.c.bf16 %v1095, %v1095
        %v1146 = vpack.c.bf16 %v1102, %v1102
        %v1147 = vpack.c.bf16 %v1109, %v1109
        %v1148 = vpack.c.bf16 %v1116, %v1116
        %v1149 = vpack.c.bf16 %v1123, %v1123
        %v1150 = vpack.c.bf16 %v1130, %v1130
        %v1151 = vld [vmem:[%s9 + $0x10] sm:$0xf]
        %v1152 = vld [vmem:[%s9 + $0x14] sm:$0xf]
        %v1153 = vld [vmem:[%s9 + $0x18] sm:$0xf]
        %v1154 = vld [vmem:[%s9 + $0x1c] sm:$0xf]
        %v1163 = vunpack.c.l.b16 %v1143
        %v1164 = vunpack.c.l.b16 %v1144
        %v1165 = vunpack.c.l.b16 %v1145
        %v1166 = vunpack.c.l.b16 %v1146
        %v1167 = vunpack.c.l.b16 %v1147
        %v1168 = vunpack.c.l.b16 %v1148
        %v1169 = vunpack.c.l.b16 %v1149
        %v1170 = vunpack.c.l.b16 %v1150
        %vm1171 = vcmask 1041409
        %v1172 = vsel %vm1171, %v1164, %v1163
        %vm1173 = vcmask 1042434
        %v1174 = vsel %vm1173, %v1165, %v1172
        %vm1175 = vcmask 1043459
        %v1176 = vsel %vm1175, %v1166, %v1174
        %vm1177 = vcmask 1044484
        %v1178 = vsel %vm1177, %v1167, %v1176
        %vm1179 = vcmask 1045509
        %v1180 = vsel %vm1179, %v1168, %v1178
        %vm1181 = vcmask 1046534
        %v1182 = vsel %vm1181, %v1169, %v1180
        %vm1183 = vcmask 1047559
        %v1184 = vsel %vm1183, %v1170, %v1182
        %v1185 = vpack.c.b16 %v1184, %v1184
        %v1190 = vunpack.c.l.b16 %v1151
        %v1191 = vunpack.c.l.b16 %v1152
        %v1192 = vunpack.c.l.b16 %v1153
        %v1193 = vunpack.c.l.b16 %v1154
        %v1194 = vpack.c.b16 %v1191, %v1190
        %v1195 = vpack.c.b16 %v1193, %v1192
        %v1199 = vsel %vm1009, %v1185, 0
        %1201 = vmatprep.subr.bf16.mxu0 0
        %1202 = vmatpush1.bf16.msra.mxu0 0
        %1203 = vmatprep.subr.bf16.mxu0 0
        %1204 = vmatpush1.bf16.msra.mxu0 0
        %1205 = vmatprep.subr.bf16.mxu0 0
        %1206 = vmatpush1.bf16.msra.mxu0 0
        %1207 = vmatprep.subr.bf16.mxu0 0
        %1208 = vmatpush1.bf16.msra.mxu0 0
        %1209 = vmatprep.subr.bf16.mxu0 0
        %1210 = vmatpush1.bf16.msra.mxu0 0
        %1211 = vmatprep.subr.bf16.mxu0 0
        %1212 = vmatpush1.bf16.msra.mxu0 0
        %1213 = vmatprep.subr.bf16.mxu0 0
        %1214 = vmatpush1.bf16.msra.mxu0 %v1195
        %1215 = vmatprep.subr.bf16.mxu0 0
        %1216 = vmatpush1.bf16.msra.mxu0 %v1194
        %1217 = vmatprep.subr.bf16.mxu0 0
        %1218 = vmatpush2.bf16.msra.mxu0 0
        %1219 = vmatprep.subr.bf16.mxu0 0
        %1220 = vmatpush2.bf16.msra.mxu0 0
        %1221 = vmatprep.subr.bf16.mxu0 0
        %1222 = vmatpush2.bf16.msra.mxu0 0
        %1223 = vmatprep.subr.bf16.mxu0 0
        %1224 = vmatpush2.bf16.msra.mxu0 0
        %1225 = vmatprep.subr.bf16.mxu0 0
        %1226 = vmatpush2.bf16.msra.mxu0 0
        %1227 = vmatprep.subr.bf16.mxu0 0
        %1228 = vmatpush2.bf16.msra.mxu0 0
        %1229 = vmatprep.subr.bf16.mxu0 0
        %1230 = vmatpush2.bf16.msra.mxu0 0
        %1231 = vmatprep.subr.bf16.mxu0 0
        %1232 = vmatpush2.bf16.msra.mxu0 0
        %1233 = vmatprep.mubr.bf16.mxu0 0
        %1234 = vmatmul.mubr.bf16.gmra.mxu0 %v1199
        %v1235 = vpop.f32.mrf.mxu0
        %v1236 = vadd.f32 0.0, %v1235
        %v1237 = vpop.f32.mrf.mxu0
        %v1238 = vpop.f32.mrf.mxu0
        %v1239 = vpop.f32.mrf.mxu0
        %1240 = vdwg.mxu0
        %v1249 = vunpack.c.l.b16 %v1131
        %v1250 = vunpack.c.l.b16 %v1132
        %v1251 = vunpack.c.l.b16 %v1133
        %v1252 = vunpack.c.l.b16 %v1134
        %v1253 = vunpack.c.l.b16 %v1135
        %v1254 = vunpack.c.l.b16 %v1136
        %v1255 = vunpack.c.l.b16 %v1137
        %v1256 = vunpack.c.l.b16 %v1138
        %v1257 = vsel %vm1171, %v1250, %v1249
        %v1258 = vsel %vm1173, %v1251, %v1257
        %v1259 = vsel %vm1175, %v1252, %v1258
        %v1260 = vsel %vm1177, %v1253, %v1259
        %v1261 = vsel %vm1179, %v1254, %v1260
        %v1262 = vsel %vm1181, %v1255, %v1261
        %v1263 = vsel %vm1183, %v1256, %v1262
        %v1264 = vpack.c.b16 %v1263, %v1263
        %v1269 = vunpack.c.l.b16 %v1139
        %v1270 = vunpack.c.l.b16 %v1140
        %v1271 = vunpack.c.l.b16 %v1141
        %v1272 = vunpack.c.l.b16 %v1142
        %v1273 = vpack.c.b16 %v1270, %v1269
        %v1274 = vpack.c.b16 %v1272, %v1271
        %v1278 = vsel %vm1009, %v1264, 0
        %1280 = vmatprep.subr.bf16.mxu0 0
        %1281 = vmatpush1.bf16.msra.mxu0 0
        %1282 = vmatprep.subr.bf16.mxu0 0
        %1283 = vmatpush1.bf16.msra.mxu0 0
        %1284 = vmatprep.subr.bf16.mxu0 0
        %1285 = vmatpush1.bf16.msra.mxu0 0
        %1286 = vmatprep.subr.bf16.mxu0 0
        %1287 = vmatpush1.bf16.msra.mxu0 0
        %1288 = vmatprep.subr.bf16.mxu0 0
        %1289 = vmatpush1.bf16.msra.mxu0 0
        %1290 = vmatprep.subr.bf16.mxu0 0
        %1291 = vmatpush1.bf16.msra.mxu0 0
        %1292 = vmatprep.subr.bf16.mxu0 0
        %1293 = vmatpush1.bf16.msra.mxu0 %v1274
        %1294 = vmatprep.subr.bf16.mxu0 0
        %1295 = vmatpush1.bf16.msra.mxu0 %v1273
        %1296 = vmatprep.subr.bf16.mxu0 0
        %1297 = vmatpush2.bf16.msra.mxu0 0
        %1298 = vmatprep.subr.bf16.mxu0 0
        %1299 = vmatpush2.bf16.msra.mxu0 0
        %1300 = vmatprep.subr.bf16.mxu0 0
        %1301 = vmatpush2.bf16.msra.mxu0 0
        %1302 = vmatprep.subr.bf16.mxu0 0
        %1303 = vmatpush2.bf16.msra.mxu0 0
        %1304 = vmatprep.subr.bf16.mxu0 0
        %1305 = vmatpush2.bf16.msra.mxu0 0
        %1306 = vmatprep.subr.bf16.mxu0 0
        %1307 = vmatpush2.bf16.msra.mxu0 0
        %1308 = vmatprep.subr.bf16.mxu0 0
        %1309 = vmatpush2.bf16.msra.mxu0 0
        %1310 = vmatprep.subr.bf16.mxu0 0
        %1311 = vmatpush2.bf16.msra.mxu0 0
        %1312 = vmatprep.mubr.bf16.mxu0 0
        %1313 = vmatmul.mubr.bf16.gmra.mxu0 %v1278
        %v1314 = vpop.f32.mrf.mxu0
        %v1315 = vadd.f32 %v1236, %v1314
        %v1316 = vpop.f32.mrf.mxu0
        %v1317 = vpop.f32.mrf.mxu0
        %v1318 = vpop.f32.mrf.mxu0
        %1319 = vdwg.mxu0
        %v1320 = vld [vmem:[%s10] sm:$0x1]
        %v1322 = vlaneseq
        %v1323 = vshrl.u32 %v1322, 7
        %v1324 = vsub.s32 0, %v1323
        %v1325 = vrot.slane %v1320, %v1324
        %v1327 = vadd.f32 %v1315, %v1325
        %v1328 = vmax.f32 %v1327, 0.0
        %v1329 = vpack.c.bf16 %v1328, %v1328
        %v1330 = vld [vmem:[%s11] sm:$0xf]
        %v1331 = vld [vmem:[%s11 + $0x4] sm:$0xf]
        %v1332 = vld [vmem:[%s11 + $0x8] sm:$0xf]
        %v1333 = vld [vmem:[%s11 + $0xc] sm:$0xf]
        %v1334 = vld [vmem:[%s12] sm:$0x1]
        %v1336 = vlaneseq
        %v1337 = vshrl.u32 %v1336, 7
        %v1338 = vsub.s32 0, %v1337
        %v1339 = vrot.slane %v1334, %v1338
        %v1345 = vunpack.c.l.b16 %v1330
        %v1346 = vunpack.c.l.b16 %v1331
        %v1347 = vunpack.c.l.b16 %v1332
        %v1348 = vunpack.c.l.b16 %v1333
        %v1349 = vpack.c.b16 %v1346, %v1345
        %v1350 = vpack.c.b16 %v1348, %v1347
        %v1354 = vsel %vm1009, %v1329, 0
        %1356 = vmatprep.subr.bf16.mxu0 0
        %1357 = vmatpush1.bf16.msra.mxu0 0
        %1358 = vmatprep.subr.bf16.mxu0 0
        %1359 = vmatpush1.bf16.msra.mxu0 0
        %1360 = vmatprep.subr.bf16.mxu0 0
        %1361 = vmatpush1.bf16.msra.mxu0 0
        %1362 = vmatprep.subr.bf16.mxu0 0
        %1363 = vmatpush1.bf16.msra.mxu0 0
        %1364 = vmatprep.subr.bf16.mxu0 0
        %1365 = vmatpush1.bf16.msra.mxu0 0
        %1366 = vmatprep.subr.bf16.mxu0 0
        %1367 = vmatpush1.bf16.msra.mxu0 0
        %1368 = vmatprep.subr.bf16.mxu0 0
        %1369 = vmatpush1.bf16.msra.mxu0 %v1350
        %1370 = vmatprep.subr.bf16.mxu0 0
        %1371 = vmatpush1.bf16.msra.mxu0 %v1349
        %1372 = vmatprep.subr.bf16.mxu0 0
        %1373 = vmatpush2.bf16.msra.mxu0 0
        %1374 = vmatprep.subr.bf16.mxu0 0
        %1375 = vmatpush2.bf16.msra.mxu0 0
        %1376 = vmatprep.subr.bf16.mxu0 0
        %1377 = vmatpush2.bf16.msra.mxu0 0
        %1378 = vmatprep.subr.bf16.mxu0 0
        %1379 = vmatpush2.bf16.msra.mxu0 0
        %1380 = vmatprep.subr.bf16.mxu0 0
        %1381 = vmatpush2.bf16.msra.mxu0 0
        %1382 = vmatprep.subr.bf16.mxu0 0
        %1383 = vmatpush2.bf16.msra.mxu0 0
        %1384 = vmatprep.subr.bf16.mxu0 0
        %1385 = vmatpush2.bf16.msra.mxu0 0
        %1386 = vmatprep.subr.bf16.mxu0 0
        %1387 = vmatpush2.bf16.msra.mxu0 0
        %1388 = vmatprep.mubr.bf16.mxu0 0
        %1389 = vmatmul.mubr.bf16.gmra.mxu0 %v1354
        %v1390 = vpop.f32.mrf.mxu0
        %v1391 = vadd.f32 %v1339, %v1390
        %v1392 = vpop.f32.mrf.mxu0
        %v1393 = vpop.f32.mrf.mxu0
        %v1394 = vpop.f32.mrf.mxu0
        %1395 = vdwg.mxu0
        %v1396 = vmax.f32 %v1391, 0.0
        %v1397 = vpack.c.bf16 %v1396, %v1396
        %v1398 = vld [vmem:[%s13] sm:$0xf]
        %v1399 = vld [vmem:[%s13 + $0x4] sm:$0xf]
        %v1400 = vld [vmem:[%s13 + $0x8] sm:$0xf]
        %v1401 = vld [vmem:[%s13 + $0xc] sm:$0xf]
        %v1402 = vld [vmem:[%s14] sm:$0x1]
        %v1404 = vlaneseq
        %v1405 = vshrl.u32 %v1404, 7
        %v1406 = vsub.s32 0, %v1405
        %v1407 = vrot.slane %v1402, %v1406
        %v1413 = vunpack.c.l.b16 %v1398
        %v1414 = vunpack.c.l.b16 %v1399
        %v1415 = vunpack.c.l.b16 %v1400
        %v1416 = vunpack.c.l.b16 %v1401
        %v1417 = vpack.c.b16 %v1414, %v1413
        %v1418 = vpack.c.b16 %v1416, %v1415
        %v1422 = vsel %vm1009, %v1397, 0
        %1424 = vmatprep.subr.bf16.mxu0 0
        %1425 = vmatpush1.bf16.msra.mxu0 0
        %1426 = vmatprep.subr.bf16.mxu0 0
        %1427 = vmatpush1.bf16.msra.mxu0 0
        %1428 = vmatprep.subr.bf16.mxu0 0
        %1429 = vmatpush1.bf16.msra.mxu0 0
        %1430 = vmatprep.subr.bf16.mxu0 0
        %1431 = vmatpush1.bf16.msra.mxu0 0
        %1432 = vmatprep.subr.bf16.mxu0 0
        %1433 = vmatpush1.bf16.msra.mxu0 0
        %1434 = vmatprep.subr.bf16.mxu0 0
        %1435 = vmatpush1.bf16.msra.mxu0 0
        %1436 = vmatprep.subr.bf16.mxu0 0
        %1437 = vmatpush1.bf16.msra.mxu0 %v1418
        %1438 = vmatprep.subr.bf16.mxu0 0
        %1439 = vmatpush1.bf16.msra.mxu0 %v1417
        %1440 = vmatprep.subr.bf16.mxu0 0
        %1441 = vmatpush2.bf16.msra.mxu0 0
        %1442 = vmatprep.subr.bf16.mxu0 0
        %1443 = vmatpush2.bf16.msra.mxu0 0
        %1444 = vmatprep.subr.bf16.mxu0 0
        %1445 = vmatpush2.bf16.msra.mxu0 0
        %1446 = vmatprep.subr.bf16.mxu0 0
        %1447 = vmatpush2.bf16.msra.mxu0 0
        %1448 = vmatprep.subr.bf16.mxu0 0
        %1449 = vmatpush2.bf16.msra.mxu0 0
        %1450 = vmatprep.subr.bf16.mxu0 0
        %1451 = vmatpush2.bf16.msra.mxu0 0
        %1452 = vmatprep.subr.bf16.mxu0 0
        %1453 = vmatpush2.bf16.msra.mxu0 0
        %1454 = vmatprep.subr.bf16.mxu0 0
        %1455 = vmatpush2.bf16.msra.mxu0 0
        %1456 = vmatprep.mubr.bf16.mxu0 0
        %1457 = vmatmul.mubr.bf16.gmra.mxu0 %v1422
        %v1458 = vpop.f32.mrf.mxu0
        %v1459 = vadd.f32 %v1407, %v1458
        %v1460 = vpop.f32.mrf.mxu0
        %v1461 = vpop.f32.mrf.mxu0
        %v1462 = vpop.f32.mrf.mxu0
        %1463 = vdwg.mxu0
        %v1464 = vld [vmem:[%s578] sm:$0xff]
        %v1465 = vadd.f32 %v1464, %v1459
        %v1466 = vsel %vm1009, %v1465, 0.0
        %1467 = vadd.xlane.f32.xlu0 %v1466
        %v1468 = vpop.xlane.xlu0 %1467
        %v1469 = vrcp.pop 32.0
        %v1470 = vmul.f32 %v1468, %v1469
        %v1471 = vsub.f32 %v1465, %v1470
        %v1472 = vmul.f32 %v1471, %v1471
        %v1473 = vsel %vm1009, %v1472, 0.0
        %1474 = vadd.xlane.f32.xlu0 %v1473
        %v1475 = vpop.xlane.xlu0 %1474
        %v1476 = vmul.f32 %v1475, %v1469
        %v1477 = vadd.f32 %v1476, 1e-05
        %v1478 = vrsqrt.pop %v1477
        %v1479 = vmul.f32 %v1471, %v1478
        %v1480 = vld [vmem:[%s15] sm:$0x1]
        %v1482 = vlaneseq
        %v1483 = vshrl.u32 %v1482, 7
        %v1484 = vsub.s32 0, %v1483
        %v1485 = vrot.slane %v1480, %v1484
        %v1487 = vmul.f32 %v1479, %v1485
        %v1488 = vld [vmem:[%s16] sm:$0x1]
        %v1490 = vlaneseq
        %v1491 = vshrl.u32 %v1490, 7
        %v1492 = vsub.s32 0, %v1491
        %v1493 = vrot.slane %v1488, %v1492
        %v1495 = vadd.f32 %v1487, %v1493
        %v1496 = vld [vmem:[%s582] sm:$0xff]
        %1498 = vset.pattern.permute.xlu0 0
        %1499 = vperm.xlu0 %1498, %v1496
        %v1500 = vpop.permute.xlu0 %1499
        %v1502 = vmul.f32 %v1495, %v1500
        %1503 = vst.msk [vmem:[%s568] sm:$0xff] %vm1009, %v1502
        %s1504 = sand.u32 %s411, 1
        %s1505 = scalar_lea.sflag [#allocation3], %s1504
        %s1506 = sand.u32 %s411, 1
        %s1507 = smul.addr %s1506, 8
        %s1508 = scalar_lea.vmem [#allocation2], %s1507
        // Predicated region
        $region89: #{point_encoding_forward.1} parent=87 // pred_check
          %p1509 = pneg %p421
        $region90: #{point_encoding_forward.1} parent=87 // pred_check_branch
          %1511 = sbr.rel (%p1509) target = $region92
        $region91: #{point_encoding_forward.1} parent=87 // pred_region
          %s1513 = ssub.s32 128, 128
          %1514 = vsyncadd %s1505, %s1513
          %s1515 = smul.addr %s31, 128
          %s1516 = scalar_lea.hbm %s17, %s1515
          %s1518 = sshll.u32 %s1508, 4
          %s1519 = int_to_ptr.vmem [resolvable:$true] %s1518
          %1521 = dma.vmem_to_hbm [thread:$0]  %s1519, 128, %s1516, %s1505
        $region92: #{point_encoding_forward.1} parent=87 // pred_fallthru
          _
      $region88: #{point_encoding_forward.1} parent=5 // pred_fallthru
        _
      %p1522 = scmp.le.s32.totalorder 2, %s26
      // Predicated region
      $region93: #{point_encoding_forward.1} parent=5 // pred_check
        %p1523 = pneg %p1522
      $region94: #{point_encoding_forward.1} parent=5 // pred_check_branch
        %1525 = sbr.rel (%p1523) target = $region96
      $region95: #{point_encoding_forward.1} parent=5 // pred_region
        %s1526 = ssub.s32 %s26, 2
        // Predicated region
        $region97: #{point_encoding_forward.1} parent=95 // pred_check
          %p1527 = pneg %p427
        $region98: #{point_encoding_forward.1} parent=95 // pred_check_branch
          %1529 = sbr.rel (%p1527) target = $region100
        $region99: #{point_encoding_forward.1} parent=95 // pred_region
          %s1530 = sand.u32 %s412, 1
          %s1531 = scalar_lea.sflag [#allocation3], %s1530
          %s1532 = sand.u32 %s412, 1
          %s1533 = smul.addr %s1532, 8
          %s1534 = scalar_lea.vmem [#allocation2], %s1533
          %1535 = dma.done %s1531, 128
        $region100: #{point_encoding_forward.1} parent=95 // pred_fallthru
          _
      $region96: #{point_encoding_forward.1} parent=5 // pred_fallthru
        _
    $region6: #{point_encoding_forward.1} parent=1 // loop_footer
      %s30 = sadd.s32 1, %s26
    $region7: #{point_encoding_forward.1} parent=1 // loop_footer_branch
      %25 = sbr.rel target = $region3
    $region8: #{point_encoding_forward.1} parent=1 // loop_exit
      _
    %1536 = vsyncpa [#allocation3], 1
    %s1537 = scalar_lea.sflag [#allocation3], 1
    %1538 = vsyncpa %s1537, 1

</llo_original>
